<compile_context>
chip_gen: v7x
topology: tpu7x:2x2x1
jax: 0.10.0
libtpu: 0.0.40
codegen_flags: <defaults>
</compile_context>

<pallas_src>
import jax
import jax.numpy as jnp
from jax import lax
from jax.experimental import pallas as pl
from jax.experimental.pallas import tpu as pltpu


def _make_kernel(N, Cin, Cmid, H, W, PAD):
    """Fused conv3x3+ReLU+conv1x1 kernel, specialized to static shapes."""
    HW = H * W

    def kernel(x_ref, w1_ref, b1_ref, w2_ref, b2_ref, out_ref, xpad_ref):
        # x_ref   : (N*Cin, HW)          VMEM  spatial (H*W) on the lane axis
        # w1_ref  : (9*Cin, Cmid, 1)     VMEM  per-(tap, ci) Cmid weight column
        # b1_ref  : (Cmid, 1)            VMEM
        # w2_ref  : (Cmid, 1)            VMEM  1x1 head weights (Cout == 1)
        # b2_ref  : (1,)                 SMEM  head bias (scalar)
        # out_ref : (N, HW)              VMEM  lane-dense logits
        # xpad_ref: (N*Cin, HW + 2*PAD)  VMEM  scratch with zero halos of PAD

        # Zero only the two halo slabs (PAD is lane aligned), then drop the
        # whole batch into the interior with one aligned, unmasked store.
        xpad_ref[:, :PAD] = jnp.zeros((N * Cin, PAD), jnp.float32)
        xpad_ref[:, PAD + HW:] = jnp.zeros((N * Cin, PAD), jnp.float32)
        xpad_ref[:, PAD:PAD + HW] = x_ref[...]

        # Column-validity masks for the dx = -1 / +1 tap groups (row wrap on
        # the flattened spatial axis); applied once per group, not per tap.
        col = lax.broadcasted_iota(jnp.int32, (1, HW), 1) % W
        mask_l = col >= 1          # valid columns for dx = -1 taps
        mask_r = col <= W - 2      # valid columns for dx = +1 taps

        # Per-batch accumulators, packed (Cmid, HW): full sublane occupancy.
        zero = jnp.zeros((Cmid, HW), jnp.float32)
        acc_m = [jnp.broadcast_to(b1_ref[...], (Cmid, HW)) for _ in range(N)]
        acc_l = [zero for _ in range(N)]
        acc_r = [zero for _ in range(N)]
        groups = {-1: acc_l, 0: acc_m, 1: acc_r}

        # Backbone 3x3 conv as a 9-tap VPU stencil: per (tap, ci) one
        # full-width broadcast FMA against the sublane-packed accumulator.
        for dy in (-1, 0, 1):
            for dx in (-1, 0, 1):
                s = dy * W + dx
                tap = (dy + 1) * 3 + (dx + 1)
                acc = groups[dx]
                for ci in range(Cin):
                    wcol = w1_ref[tap * Cin + ci]                 # (Cmid, 1)
                    for n in range(N):
                        plane = xpad_ref[pl.ds(n * Cin + ci, 1),
                                         pl.ds(PAD + s, HW)]      # (1, HW)
                        acc[n] = acc[n] + wcol * plane            # (Cmid, HW)

        # Combine dx groups (mask wrap columns once), ReLU, then the 1x1
        # segmentation head as a weighted cross-sublane reduce + bias.
        logits = []
        for n in range(N):
            feat = acc_m[n]
            feat = feat + jnp.where(mask_l, acc_l[n], 0.0)
            feat = feat + jnp.where(mask_r, acc_r[n], 0.0)
            feat = jnp.maximum(feat, 0.0)                          # ReLU
            logit = jnp.sum(w2_ref[...] * feat, axis=0, keepdims=True)
            logits.append(logit + b2_ref[0])
        out_ref[...] = jnp.concatenate(logits, axis=0)             # one store

    return kernel


@jax.jit
def combined_model(x_nchw, w1, b1, w2, b2):
    """x_nchw: (N, Cin, H, W) f32 -> logits (N, Cout=1, H, W) f32."""
    N, Cin, H, W = x_nchw.shape
    KH, KW, _, Cmid = w1.shape
    Cout = w2.shape[-1]
    assert (KH, KW) == (3, 3) and Cout == 1

    HW = H * W
    # Halo rounded up to a lane multiple so the interior copy is aligned.
    PAD = max(128, ((W + 1 + 127) // 128) * 128)

    # Free reshapes only: keep NCHW order, flatten (N, Cin) onto sublanes and
    # the spatial axis onto lanes.
    x_flat = x_nchw.reshape(N * Cin, HW).astype(jnp.float32)
    # HWIO (3,3,Cin,Cmid) -> (9*Cin, Cmid, 1): row k = tap*Cin + ci holds the
    # Cmid output-channel column for that (tap, input-channel) pair.
    w1_cols = w1.reshape(9 * Cin, Cmid, 1).astype(jnp.float32)
    b1_col = b1.reshape(Cmid, 1).astype(jnp.float32)
    w2_col = w2.reshape(Cmid, 1).astype(jnp.float32)
    b2_s = b2.reshape(Cout).astype(jnp.float32)

    # Whole problem (a few tens of KB) fits in VMEM on every generation:
    # single invocation, no grid, no per-step pipeline overhead.
    out_flat = pl.pallas_call(
        _make_kernel(N, Cin, Cmid, H, W, PAD),
        out_shape=jax.ShapeDtypeStruct((N, HW), jnp.float32),
        in_specs=[
            pl.BlockSpec(memory_space=pltpu.MemorySpace.VMEM),   # x
            pl.BlockSpec(memory_space=pltpu.MemorySpace.VMEM),   # w1 columns
            pl.BlockSpec(memory_space=pltpu.MemorySpace.VMEM),   # b1 column
            pl.BlockSpec(memory_space=pltpu.MemorySpace.VMEM),   # w2 column
            pl.BlockSpec(memory_space=pltpu.MemorySpace.SMEM),   # b2 scalar
        ],
        out_specs=pl.BlockSpec(memory_space=pltpu.MemorySpace.VMEM),
        scratch_shapes=[
            pltpu.VMEM((N * Cin, HW + 2 * PAD), jnp.float32),
        ],
    )(x_flat, w1_cols, b1_col, w2_col, b2_s)

    return out_flat.reshape(N, Cout, H, W)


def _reference(x_nchw, w1, b1, w2, b2):
    """Pure-JAX reference (lax convs) for correctness checking."""
    y = lax.conv_general_dilated(
        x_nchw, w1, window_strides=(1, 1), padding="SAME",
        dimension_numbers=("NCHW", "HWIO", "NCHW"),
    ) + b1.reshape(1, -1, 1, 1)
    y = jnp.maximum(y, 0.0)
    z = lax.conv_general_dilated(
        y, w2.reshape(1, 1, *w2.shape), window_strides=(1, 1), padding="SAME",
        dimension_numbers=("NCHW", "HWIO", "NCHW"),
    ) + b2.reshape(1, -1, 1, 1)
    return z


if __name__ == "__main__":
    N, Cin, H, W = 2, 4, 16, 16
    Cmid, Cout = 8, 1

    key = jax.random.PRNGKey(0)
    kx, kw1, kb1, kw2, kb2 = jax.random.split(key, 5)

    x = jax.random.normal(kx, (N, Cin, H, W), jnp.float32)
    w1 = jax.random.normal(kw1, (3, 3, Cin, Cmid), jnp.float32) * 0.1
    b1 = jax.random.normal(kb1, (Cmid,), jnp.float32) * 0.1
    w2 = jax.random.normal(kw2, (Cmid, Cout), jnp.float32) * 0.1
    b2 = jax.random.normal(kb2, (Cout,), jnp.float32) * 0.1

    out = combined_model(x, w1, b1, w2, b2)
    out = jax.block_until_ready(out)

    ref = jax.block_until_ready(_reference(x, w1, b1, w2, b2))
    assert out.shape == (N, Cout, H, W)
    assert jnp.allclose(out, ref, atol=1e-4, rtol=1e-4), "mismatch vs reference"

    print("KERNEL_OK")
</pallas_src>

<mosaic_0001>
module attributes {stable_mosaic.version = 11 : i64} {
  func.func @kernel(%arg0: memref<8x256xf32, #tpu.memory_space<vmem>>, %arg1: memref<36x8x1xf32, #tpu.memory_space<vmem>>, %arg2: memref<8x1xf32, #tpu.memory_space<vmem>>, %arg3: memref<8x1xf32, #tpu.memory_space<vmem>>, %arg4: memref<1xf32, #tpu.memory_space<smem>>, %arg5: memref<2x256xf32, #tpu.memory_space<vmem>>, %arg6: memref<8x512xf32, #tpu.memory_space<vmem>>) attributes {dimension_semantics = [], scalar_prefetch = 0 : i64, scratch_operands = 1 : i64, tpu.core_type = #tpu.core_type<tc>} {
    %cst = arith.constant 0.000000e+00 : f32
    %0 = vector.broadcast %cst : f32 to vector<8x128xf32>
    %c0 = arith.constant 0 : index
    %c0_0 = arith.constant 0 : index
    %1 = vector.load %arg6[%c0, %c0_0] : memref<8x512xf32, #tpu.memory_space<vmem>>, vector<8x128xf32>
    tpu.vector_store %arg6[%c0, %c0_0], %0 {strides = array<i32>} : memref<8x512xf32, #tpu.memory_space<vmem>>, vector<8x128xf32>,
    %cst_1 = arith.constant 0.000000e+00 : f32
    %2 = vector.broadcast %cst_1 : f32 to vector<8x128xf32>
    %c0_2 = arith.constant 0 : index
    %c384 = arith.constant 384 : index
    %3 = vector.load %arg6[%c0_2, %c384] : memref<8x512xf32, #tpu.memory_space<vmem>>, vector<8x128xf32>
    tpu.vector_store %arg6[%c0_2, %c384], %2 {strides = array<i32>} : memref<8x512xf32, #tpu.memory_space<vmem>>, vector<8x128xf32>,
    %c0_3 = arith.constant 0 : index
    %c0_4 = arith.constant 0 : index
    %4 = vector.load %arg0[%c0_3, %c0_4] : memref<8x256xf32, #tpu.memory_space<vmem>>, vector<8x256xf32>
    %c0_5 = arith.constant 0 : index
    %c128 = arith.constant 128 : index
    %5 = vector.load %arg6[%c0_5, %c128] : memref<8x512xf32, #tpu.memory_space<vmem>>, vector<8x256xf32>
    tpu.vector_store %arg6[%c0_5, %c128], %4 {strides = array<i32>} : memref<8x512xf32, #tpu.memory_space<vmem>>, vector<8x256xf32>,
    %6 = tpu.iota {dimensions = array<i32: 1>} : vector<1x256xi32>
    %c16_i32 = arith.constant 16 : i32
    %c0_i32 = arith.constant 0 : i32
    %7 = arith.cmpi eq, %c16_i32, %c0_i32 : i32
    %c1_i32 = arith.constant 1 : i32
    %8 = arith.select %7, %c1_i32, %c16_i32 : i32
    %9 = vector.broadcast %8 : i32 to vector<1x256xi32>
    %10 = arith.remsi %6, %9 : vector<1x256xi32>
    %c0_i32_6 = arith.constant 0 : i32
    %11 = vector.broadcast %c0_i32_6 : i32 to vector<1x256xi32>
    %12 = arith.cmpi ne, %10, %11 : vector<1x256xi32>
    %c0_i32_7 = arith.constant 0 : i32
    %13 = vector.broadcast %c0_i32_7 : i32 to vector<1x256xi32>
    %14 = arith.cmpi slt, %10, %13 : vector<1x256xi32>
    %c0_i32_8 = arith.constant 0 : i32
    %15 = arith.cmpi slt, %8, %c0_i32_8 : i32
    %16 = vector.broadcast %15 : i1 to vector<1x256xi1>
    %17 = vector.broadcast %16 : vector<1x256xi1> to vector<1x256xi1>
    %18 = arith.xori %14, %17 : vector<1x256xi1>
    %19 = arith.andi %18, %12 : vector<1x256xi1>
    %20 = vector.broadcast %8 : i32 to vector<1x256xi32>
    %21 = arith.addi %10, %20 : vector<1x256xi32>
    %22 = arith.select %19, %21, %10 : vector<1x256xi1>, vector<1x256xi32>
    %c1_i32_9 = arith.constant 1 : i32
    %23 = vector.broadcast %c1_i32_9 : i32 to vector<1x256xi32>
    %24 = arith.cmpi sge, %22, %23 : vector<1x256xi32>
    %c14_i32 = arith.constant 14 : i32
    %25 = vector.broadcast %c14_i32 : i32 to vector<1x256xi32>
    %26 = arith.cmpi sle, %22, %25 : vector<1x256xi32>
    %cst_10 = arith.constant 0.000000e+00 : f32
    %27 = vector.broadcast %cst_10 : f32 to vector<8x256xf32>
    %c0_11 = arith.constant 0 : index
    %c0_12 = arith.constant 0 : index
    %28 = vector.load %arg2[%c0_11, %c0_12] : memref<8x1xf32, #tpu.memory_space<vmem>>, vector<8x1xf32>
    %29 = vector.shape_cast %28 : vector<8x1xf32> to vector<8x1xf32>
    %30 = vector.broadcast %29 : vector<8x1xf32> to vector<8x256xf32>
    %c0_13 = arith.constant 0 : index
    %c0_14 = arith.constant 0 : index
    %31 = vector.load %arg2[%c0_13, %c0_14] : memref<8x1xf32, #tpu.memory_space<vmem>>, vector<8x1xf32>
    %32 = vector.shape_cast %31 : vector<8x1xf32> to vector<8x1xf32>
    %33 = vector.broadcast %32 : vector<8x1xf32> to vector<8x256xf32>
    %c0_15 = arith.constant 0 : index
    %c0_16 = arith.constant 0 : index
    %c0_17 = arith.constant 0 : index
    %34 = vector.load %arg1[%c0_15, %c0_16, %c0_17] : memref<36x8x1xf32, #tpu.memory_space<vmem>>, vector<1x8x1xf32>
    %35 = vector.shape_cast %34 : vector<1x8x1xf32> to vector<8x1xf32>
    %c0_18 = arith.constant 0 : index
    %c111 = arith.constant 111 : index
    %36 = vector.load %arg6[%c0_18, %c111] : memref<8x512xf32, #tpu.memory_space<vmem>>, vector<1x256xf32>
    %37 = vector.broadcast %35 : vector<8x1xf32> to vector<8x256xf32>
    %38 = vector.broadcast %36 : vector<1x256xf32> to vector<8x256xf32>
    %39 = arith.mulf %37, %38 : vector<8x256xf32>
    %40 = arith.addf %27, %39 : vector<8x256xf32>
    %c4 = arith.constant 4 : index
    %c111_19 = arith.constant 111 : index
    %41 = vector.load %arg6[%c4, %c111_19] : memref<8x512xf32, #tpu.memory_space<vmem>>, vector<1x256xf32>
    %42 = vector.broadcast %35 : vector<8x1xf32> to vector<8x256xf32>
    %43 = vector.broadcast %41 : vector<1x256xf32> to vector<8x256xf32>
    %44 = arith.mulf %42, %43 : vector<8x256xf32>
    %45 = arith.addf %27, %44 : vector<8x256xf32>
    %c1 = arith.constant 1 : index
    %c0_20 = arith.constant 0 : index
    %c0_21 = arith.constant 0 : index
    %46 = vector.load %arg1[%c1, %c0_20, %c0_21] : memref<36x8x1xf32, #tpu.memory_space<vmem>>, vector<1x8x1xf32>
    %47 = vector.shape_cast %46 : vector<1x8x1xf32> to vector<8x1xf32>
    %c1_22 = arith.constant 1 : index
    %c111_23 = arith.constant 111 : index
    %48 = vector.load %arg6[%c1_22, %c111_23] : memref<8x512xf32, #tpu.memory_space<vmem>>, vector<1x256xf32>
    %49 = vector.broadcast %47 : vector<8x1xf32> to vector<8x256xf32>
    %50 = vector.broadcast %48 : vector<1x256xf32> to vector<8x256xf32>
    %51 = arith.mulf %49, %50 : vector<8x256xf32>
    %52 = arith.addf %40, %51 : vector<8x256xf32>
    %c5 = arith.constant 5 : index
    %c111_24 = arith.constant 111 : index
    %53 = vector.load %arg6[%c5, %c111_24] : memref<8x512xf32, #tpu.memory_space<vmem>>, vector<1x256xf32>
    %54 = vector.broadcast %47 : vector<8x1xf32> to vector<8x256xf32>
    %55 = vector.broadcast %53 : vector<1x256xf32> to vector<8x256xf32>
    %56 = arith.mulf %54, %55 : vector<8x256xf32>
    %57 = arith.addf %45, %56 : vector<8x256xf32>
    %c2 = arith.constant 2 : index
    %c0_25 = arith.constant 0 : index
    %c0_26 = arith.constant 0 : index
    %58 = vector.load %arg1[%c2, %c0_25, %c0_26] : memref<36x8x1xf32, #tpu.memory_space<vmem>>, vector<1x8x1xf32>
    %59 = vector.shape_cast %58 : vector<1x8x1xf32> to vector<8x1xf32>
    %c2_27 = arith.constant 2 : index
    %c111_28 = arith.constant 111 : index
    %60 = vector.load %arg6[%c2_27, %c111_28] : memref<8x512xf32, #tpu.memory_space<vmem>>, vector<1x256xf32>
    %61 = vector.broadcast %59 : vector<8x1xf32> to vector<8x256xf32>
    %62 = vector.broadcast %60 : vector<1x256xf32> to vector<8x256xf32>
    %63 = arith.mulf %61, %62 : vector<8x256xf32>
    %64 = arith.addf %52, %63 : vector<8x256xf32>
    %c6 = arith.constant 6 : index
    %c111_29 = arith.constant 111 : index
    %65 = vector.load %arg6[%c6, %c111_29] : memref<8x512xf32, #tpu.memory_space<vmem>>, vector<1x256xf32>
    %66 = vector.broadcast %59 : vector<8x1xf32> to vector<8x256xf32>
    %67 = vector.broadcast %65 : vector<1x256xf32> to vector<8x256xf32>
    %68 = arith.mulf %66, %67 : vector<8x256xf32>
    %69 = arith.addf %57, %68 : vector<8x256xf32>
    %c3 = arith.constant 3 : index
    %c0_30 = arith.constant 0 : index
    %c0_31 = arith.constant 0 : index
    %70 = vector.load %arg1[%c3, %c0_30, %c0_31] : memref<36x8x1xf32, #tpu.memory_space<vmem>>, vector<1x8x1xf32>
    %71 = vector.shape_cast %70 : vector<1x8x1xf32> to vector<8x1xf32>
    %c3_32 = arith.constant 3 : index
    %c111_33 = arith.constant 111 : index
    %72 = vector.load %arg6[%c3_32, %c111_33] : memref<8x512xf32, #tpu.memory_space<vmem>>, vector<1x256xf32>
    %73 = vector.broadcast %71 : vector<8x1xf32> to vector<8x256xf32>
    %74 = vector.broadcast %72 : vector<1x256xf32> to vector<8x256xf32>
    %75 = arith.mulf %73, %74 : vector<8x256xf32>
    %76 = arith.addf %64, %75 : vector<8x256xf32>
    %c7 = arith.constant 7 : index
    %c111_34 = arith.constant 111 : index
    %77 = vector.load %arg6[%c7, %c111_34] : memref<8x512xf32, #tpu.memory_space<vmem>>, vector<1x256xf32>
    %78 = vector.broadcast %71 : vector<8x1xf32> to vector<8x256xf32>
    %79 = vector.broadcast %77 : vector<1x256xf32> to vector<8x256xf32>
    %80 = arith.mulf %78, %79 : vector<8x256xf32>
    %81 = arith.addf %69, %80 : vector<8x256xf32>
    %c4_35 = arith.constant 4 : index
    %c0_36 = arith.constant 0 : index
    %c0_37 = arith.constant 0 : index
    %82 = vector.load %arg1[%c4_35, %c0_36, %c0_37] : memref<36x8x1xf32, #tpu.memory_space<vmem>>, vector<1x8x1xf32>
    %83 = vector.shape_cast %82 : vector<1x8x1xf32> to vector<8x1xf32>
    %c0_38 = arith.constant 0 : index
    %c112 = arith.constant 112 : index
    %84 = vector.load %arg6[%c0_38, %c112] : memref<8x512xf32, #tpu.memory_space<vmem>>, vector<1x256xf32>
    %85 = vector.broadcast %83 : vector<8x1xf32> to vector<8x256xf32>
    %86 = vector.broadcast %84 : vector<1x256xf32> to vector<8x256xf32>
    %87 = arith.mulf %85, %86 : vector<8x256xf32>
    %88 = arith.addf %30, %87 : vector<8x256xf32>
    %c4_39 = arith.constant 4 : index
    %c112_40 = arith.constant 112 : index
    %89 = vector.load %arg6[%c4_39, %c112_40] : memref<8x512xf32, #tpu.memory_space<vmem>>, vector<1x256xf32>
    %90 = vector.broadcast %83 : vector<8x1xf32> to vector<8x256xf32>
    %91 = vector.broadcast %89 : vector<1x256xf32> to vector<8x256xf32>
    %92 = arith.mulf %90, %91 : vector<8x256xf32>
    %93 = arith.addf %33, %92 : vector<8x256xf32>
    %c5_41 = arith.constant 5 : index
    %c0_42 = arith.constant 0 : index
    %c0_43 = arith.constant 0 : index
    %94 = vector.load %arg1[%c5_41, %c0_42, %c0_43] : memref<36x8x1xf32, #tpu.memory_space<vmem>>, vector<1x8x1xf32>
    %95 = vector.shape_cast %94 : vector<1x8x1xf32> to vector<8x1xf32>
    %c1_44 = arith.constant 1 : index
    %c112_45 = arith.constant 112 : index
    %96 = vector.load %arg6[%c1_44, %c112_45] : memref<8x512xf32, #tpu.memory_space<vmem>>, vector<1x256xf32>
    %97 = vector.broadcast %95 : vector<8x1xf32> to vector<8x256xf32>
    %98 = vector.broadcast %96 : vector<1x256xf32> to vector<8x256xf32>
    %99 = arith.mulf %97, %98 : vector<8x256xf32>
    %100 = arith.addf %88, %99 : vector<8x256xf32>
    %c5_46 = arith.constant 5 : index
    %c112_47 = arith.constant 112 : index
    %101 = vector.load %arg6[%c5_46, %c112_47] : memref<8x512xf32, #tpu.memory_space<vmem>>, vector<1x256xf32>
    %102 = vector.broadcast %95 : vector<8x1xf32> to vector<8x256xf32>
    %103 = vector.broadcast %101 : vector<1x256xf32> to vector<8x256xf32>
    %104 = arith.mulf %102, %103 : vector<8x256xf32>
    %105 = arith.addf %93, %104 : vector<8x256xf32>
    %c6_48 = arith.constant 6 : index
    %c0_49 = arith.constant 0 : index
    %c0_50 = arith.constant 0 : index
    %106 = vector.load %arg1[%c6_48, %c0_49, %c0_50] : memref<36x8x1xf32, #tpu.memory_space<vmem>>, vector<1x8x1xf32>
    %107 = vector.shape_cast %106 : vector<1x8x1xf32> to vector<8x1xf32>
    %c2_51 = arith.constant 2 : index
    %c112_52 = arith.constant 112 : index
    %108 = vector.load %arg6[%c2_51, %c112_52] : memref<8x512xf32, #tpu.memory_space<vmem>>, vector<1x256xf32>
    %109 = vector.broadcast %107 : vector<8x1xf32> to vector<8x256xf32>
    %110 = vector.broadcast %108 : vector<1x256xf32> to vector<8x256xf32>
    %111 = arith.mulf %109, %110 : vector<8x256xf32>
    %112 = arith.addf %100, %111 : vector<8x256xf32>
    %c6_53 = arith.constant 6 : index
    %c112_54 = arith.constant 112 : index
    %113 = vector.load %arg6[%c6_53, %c112_54] : memref<8x512xf32, #tpu.memory_space<vmem>>, vector<1x256xf32>
    %114 = vector.broadcast %107 : vector<8x1xf32> to vector<8x256xf32>
    %115 = vector.broadcast %113 : vector<1x256xf32> to vector<8x256xf32>
    %116 = arith.mulf %114, %115 : vector<8x256xf32>
    %117 = arith.addf %105, %116 : vector<8x256xf32>
    %c7_55 = arith.constant 7 : index
    %c0_56 = arith.constant 0 : index
    %c0_57 = arith.constant 0 : index
    %118 = vector.load %arg1[%c7_55, %c0_56, %c0_57] : memref<36x8x1xf32, #tpu.memory_space<vmem>>, vector<1x8x1xf32>
    %119 = vector.shape_cast %118 : vector<1x8x1xf32> to vector<8x1xf32>
    %c3_58 = arith.constant 3 : index
    %c112_59 = arith.constant 112 : index
    %120 = vector.load %arg6[%c3_58, %c112_59] : memref<8x512xf32, #tpu.memory_space<vmem>>, vector<1x256xf32>
    %121 = vector.broadcast %119 : vector<8x1xf32> to vector<8x256xf32>
    %122 = vector.broadcast %120 : vector<1x256xf32> to vector<8x256xf32>
    %123 = arith.mulf %121, %122 : vector<8x256xf32>
    %124 = arith.addf %112, %123 : vector<8x256xf32>
    %c7_60 = arith.constant 7 : index
    %c112_61 = arith.constant 112 : index
    %125 = vector.load %arg6[%c7_60, %c112_61] : memref<8x512xf32, #tpu.memory_space<vmem>>, vector<1x256xf32>
    %126 = vector.broadcast %119 : vector<8x1xf32> to vector<8x256xf32>
    %127 = vector.broadcast %125 : vector<1x256xf32> to vector<8x256xf32>
    %128 = arith.mulf %126, %127 : vector<8x256xf32>
    %129 = arith.addf %117, %128 : vector<8x256xf32>
    %c8 = arith.constant 8 : index
    %c0_62 = arith.constant 0 : index
    %c0_63 = arith.constant 0 : index
    %130 = vector.load %arg1[%c8, %c0_62, %c0_63] : memref<36x8x1xf32, #tpu.memory_space<vmem>>, vector<1x8x1xf32>
    %131 = vector.shape_cast %130 : vector<1x8x1xf32> to vector<8x1xf32>
    %c0_64 = arith.constant 0 : index
    %c113 = arith.constant 113 : index
    %132 = vector.load %arg6[%c0_64, %c113] : memref<8x512xf32, #tpu.memory_space<vmem>>, vector<1x256xf32>
    %133 = vector.broadcast %131 : vector<8x1xf32> to vector<8x256xf32>
    %134 = vector.broadcast %132 : vector<1x256xf32> to vector<8x256xf32>
    %135 = arith.mulf %133, %134 : vector<8x256xf32>
    %136 = arith.addf %27, %135 : vector<8x256xf32>
    %c4_65 = arith.constant 4 : index
    %c113_66 = arith.constant 113 : index
    %137 = vector.load %arg6[%c4_65, %c113_66] : memref<8x512xf32, #tpu.memory_space<vmem>>, vector<1x256xf32>
    %138 = vector.broadcast %131 : vector<8x1xf32> to vector<8x256xf32>
    %139 = vector.broadcast %137 : vector<1x256xf32> to vector<8x256xf32>
    %140 = arith.mulf %138, %139 : vector<8x256xf32>
    %141 = arith.addf %27, %140 : vector<8x256xf32>
    %c9 = arith.constant 9 : index
    %c0_67 = arith.constant 0 : index
    %c0_68 = arith.constant 0 : index
    %142 = vector.load %arg1[%c9, %c0_67, %c0_68] : memref<36x8x1xf32, #tpu.memory_space<vmem>>, vector<1x8x1xf32>
    %143 = vector.shape_cast %142 : vector<1x8x1xf32> to vector<8x1xf32>
    %c1_69 = arith.constant 1 : index
    %c113_70 = arith.constant 113 : index
    %144 = vector.load %arg6[%c1_69, %c113_70] : memref<8x512xf32, #tpu.memory_space<vmem>>, vector<1x256xf32>
    %145 = vector.broadcast %143 : vector<8x1xf32> to vector<8x256xf32>
    %146 = vector.broadcast %144 : vector<1x256xf32> to vector<8x256xf32>
    %147 = arith.mulf %145, %146 : vector<8x256xf32>
    %148 = arith.addf %136, %147 : vector<8x256xf32>
    %c5_71 = arith.constant 5 : index
    %c113_72 = arith.constant 113 : index
    %149 = vector.load %arg6[%c5_71, %c113_72] : memref<8x512xf32, #tpu.memory_space<vmem>>, vector<1x256xf32>
    %150 = vector.broadcast %143 : vector<8x1xf32> to vector<8x256xf32>
    %151 = vector.broadcast %149 : vector<1x256xf32> to vector<8x256xf32>
    %152 = arith.mulf %150, %151 : vector<8x256xf32>
    %153 = arith.addf %141, %152 : vector<8x256xf32>
    %c10 = arith.constant 10 : index
    %c0_73 = arith.constant 0 : index
    %c0_74 = arith.constant 0 : index
    %154 = vector.load %arg1[%c10, %c0_73, %c0_74] : memref<36x8x1xf32, #tpu.memory_space<vmem>>, vector<1x8x1xf32>
    %155 = vector.shape_cast %154 : vector<1x8x1xf32> to vector<8x1xf32>
    %c2_75 = arith.constant 2 : index
    %c113_76 = arith.constant 113 : index
    %156 = vector.load %arg6[%c2_75, %c113_76] : memref<8x512xf32, #tpu.memory_space<vmem>>, vector<1x256xf32>
    %157 = vector.broadcast %155 : vector<8x1xf32> to vector<8x256xf32>
    %158 = vector.broadcast %156 : vector<1x256xf32> to vector<8x256xf32>
    %159 = arith.mulf %157, %158 : vector<8x256xf32>
    %160 = arith.addf %148, %159 : vector<8x256xf32>
    %c6_77 = arith.constant 6 : index
    %c113_78 = arith.constant 113 : index
    %161 = vector.load %arg6[%c6_77, %c113_78] : memref<8x512xf32, #tpu.memory_space<vmem>>, vector<1x256xf32>
    %162 = vector.broadcast %155 : vector<8x1xf32> to vector<8x256xf32>
    %163 = vector.broadcast %161 : vector<1x256xf32> to vector<8x256xf32>
    %164 = arith.mulf %162, %163 : vector<8x256xf32>
    %165 = arith.addf %153, %164 : vector<8x256xf32>
    %c11 = arith.constant 11 : index
    %c0_79 = arith.constant 0 : index
    %c0_80 = arith.constant 0 : index
    %166 = vector.load %arg1[%c11, %c0_79, %c0_80] : memref<36x8x1xf32, #tpu.memory_space<vmem>>, vector<1x8x1xf32>
    %167 = vector.shape_cast %166 : vector<1x8x1xf32> to vector<8x1xf32>
    %c3_81 = arith.constant 3 : index
    %c113_82 = arith.constant 113 : index
    %168 = vector.load %arg6[%c3_81, %c113_82] : memref<8x512xf32, #tpu.memory_space<vmem>>, vector<1x256xf32>
    %169 = vector.broadcast %167 : vector<8x1xf32> to vector<8x256xf32>
    %170 = vector.broadcast %168 : vector<1x256xf32> to vector<8x256xf32>
    %171 = arith.mulf %169, %170 : vector<8x256xf32>
    %172 = arith.addf %160, %171 : vector<8x256xf32>
    %c7_83 = arith.constant 7 : index
    %c113_84 = arith.constant 113 : index
    %173 = vector.load %arg6[%c7_83, %c113_84] : memref<8x512xf32, #tpu.memory_space<vmem>>, vector<1x256xf32>
    %174 = vector.broadcast %167 : vector<8x1xf32> to vector<8x256xf32>
    %175 = vector.broadcast %173 : vector<1x256xf32> to vector<8x256xf32>
    %176 = arith.mulf %174, %175 : vector<8x256xf32>
    %177 = arith.addf %165, %176 : vector<8x256xf32>
    %c12 = arith.constant 12 : index
    %c0_85 = arith.constant 0 : index
    %c0_86 = arith.constant 0 : index
    %178 = vector.load %arg1[%c12, %c0_85, %c0_86] : memref<36x8x1xf32, #tpu.memory_space<vmem>>, vector<1x8x1xf32>
    %179 = vector.shape_cast %178 : vector<1x8x1xf32> to vector<8x1xf32>
    %c0_87 = arith.constant 0 : index
    %c127 = arith.constant 127 : index
    %180 = vector.load %arg6[%c0_87, %c127] : memref<8x512xf32, #tpu.memory_space<vmem>>, vector<1x256xf32>
    %181 = vector.broadcast %179 : vector<8x1xf32> to vector<8x256xf32>
    %182 = vector.broadcast %180 : vector<1x256xf32> to vector<8x256xf32>
    %183 = arith.mulf %181, %182 : vector<8x256xf32>
    %184 = arith.addf %76, %183 : vector<8x256xf32>
    %c4_88 = arith.constant 4 : index
    %c127_89 = arith.constant 127 : index
    %185 = vector.load %arg6[%c4_88, %c127_89] : memref<8x512xf32, #tpu.memory_space<vmem>>, vector<1x256xf32>
    %186 = vector.broadcast %179 : vector<8x1xf32> to vector<8x256xf32>
    %187 = vector.broadcast %185 : vector<1x256xf32> to vector<8x256xf32>
    %188 = arith.mulf %186, %187 : vector<8x256xf32>
    %189 = arith.addf %81, %188 : vector<8x256xf32>
    %c13 = arith.constant 13 : index
    %c0_90 = arith.constant 0 : index
    %c0_91 = arith.constant 0 : index
    %190 = vector.load %arg1[%c13, %c0_90, %c0_91] : memref<36x8x1xf32, #tpu.memory_space<vmem>>, vector<1x8x1xf32>
    %191 = vector.shape_cast %190 : vector<1x8x1xf32> to vector<8x1xf32>
    %c1_92 = arith.constant 1 : index
    %c127_93 = arith.constant 127 : index
    %192 = vector.load %arg6[%c1_92, %c127_93] : memref<8x512xf32, #tpu.memory_space<vmem>>, vector<1x256xf32>
    %193 = vector.broadcast %191 : vector<8x1xf32> to vector<8x256xf32>
    %194 = vector.broadcast %192 : vector<1x256xf32> to vector<8x256xf32>
    %195 = arith.mulf %193, %194 : vector<8x256xf32>
    %196 = arith.addf %184, %195 : vector<8x256xf32>
    %c5_94 = arith.constant 5 : index
    %c127_95 = arith.constant 127 : index
    %197 = vector.load %arg6[%c5_94, %c127_95] : memref<8x512xf32, #tpu.memory_space<vmem>>, vector<1x256xf32>
    %198 = vector.broadcast %191 : vector<8x1xf32> to vector<8x256xf32>
    %199 = vector.broadcast %197 : vector<1x256xf32> to vector<8x256xf32>
    %200 = arith.mulf %198, %199 : vector<8x256xf32>
    %201 = arith.addf %189, %200 : vector<8x256xf32>
    %c14 = arith.constant 14 : index
    %c0_96 = arith.constant 0 : index
    %c0_97 = arith.constant 0 : index
    %202 = vector.load %arg1[%c14, %c0_96, %c0_97] : memref<36x8x1xf32, #tpu.memory_space<vmem>>, vector<1x8x1xf32>
    %203 = vector.shape_cast %202 : vector<1x8x1xf32> to vector<8x1xf32>
    %c2_98 = arith.constant 2 : index
    %c127_99 = arith.constant 127 : index
    %204 = vector.load %arg6[%c2_98, %c127_99] : memref<8x512xf32, #tpu.memory_space<vmem>>, vector<1x256xf32>
    %205 = vector.broadcast %203 : vector<8x1xf32> to vector<8x256xf32>
    %206 = vector.broadcast %204 : vector<1x256xf32> to vector<8x256xf32>
    %207 = arith.mulf %205, %206 : vector<8x256xf32>
    %208 = arith.addf %196, %207 : vector<8x256xf32>
    %c6_100 = arith.constant 6 : index
    %c127_101 = arith.constant 127 : index
    %209 = vector.load %arg6[%c6_100, %c127_101] : memref<8x512xf32, #tpu.memory_space<vmem>>, vector<1x256xf32>
    %210 = vector.broadcast %203 : vector<8x1xf32> to vector<8x256xf32>
    %211 = vector.broadcast %209 : vector<1x256xf32> to vector<8x256xf32>
    %212 = arith.mulf %210, %211 : vector<8x256xf32>
    %213 = arith.addf %201, %212 : vector<8x256xf32>
    %c15 = arith.constant 15 : index
    %c0_102 = arith.constant 0 : index
    %c0_103 = arith.constant 0 : index
    %214 = vector.load %arg1[%c15, %c0_102, %c0_103] : memref<36x8x1xf32, #tpu.memory_space<vmem>>, vector<1x8x1xf32>
    %215 = vector.shape_cast %214 : vector<1x8x1xf32> to vector<8x1xf32>
    %c3_104 = arith.constant 3 : index
    %c127_105 = arith.constant 127 : index
    %216 = vector.load %arg6[%c3_104, %c127_105] : memref<8x512xf32, #tpu.memory_space<vmem>>, vector<1x256xf32>
    %217 = vector.broadcast %215 : vector<8x1xf32> to vector<8x256xf32>
    %218 = vector.broadcast %216 : vector<1x256xf32> to vector<8x256xf32>
    %219 = arith.mulf %217, %218 : vector<8x256xf32>
    %220 = arith.addf %208, %219 : vector<8x256xf32>
    %c7_106 = arith.constant 7 : index
    %c127_107 = arith.constant 127 : index
    %221 = vector.load %arg6[%c7_106, %c127_107] : memref<8x512xf32, #tpu.memory_space<vmem>>, vector<1x256xf32>
    %222 = vector.broadcast %215 : vector<8x1xf32> to vector<8x256xf32>
    %223 = vector.broadcast %221 : vector<1x256xf32> to vector<8x256xf32>
    %224 = arith.mulf %222, %223 : vector<8x256xf32>
    %225 = arith.addf %213, %224 : vector<8x256xf32>
    %c16 = arith.constant 16 : index
    %c0_108 = arith.constant 0 : index
    %c0_109 = arith.constant 0 : index
    %226 = vector.load %arg1[%c16, %c0_108, %c0_109] : memref<36x8x1xf32, #tpu.memory_space<vmem>>, vector<1x8x1xf32>
    %227 = vector.shape_cast %226 : vector<1x8x1xf32> to vector<8x1xf32>
    %c0_110 = arith.constant 0 : index
    %c128_111 = arith.constant 128 : index
    %228 = vector.load %arg6[%c0_110, %c128_111] : memref<8x512xf32, #tpu.memory_space<vmem>>, vector<1x256xf32>
    %229 = vector.broadcast %227 : vector<8x1xf32> to vector<8x256xf32>
    %230 = vector.broadcast %228 : vector<1x256xf32> to vector<8x256xf32>
    %231 = arith.mulf %229, %230 : vector<8x256xf32>
    %232 = arith.addf %124, %231 : vector<8x256xf32>
    %c4_112 = arith.constant 4 : index
    %c128_113 = arith.constant 128 : index
    %233 = vector.load %arg6[%c4_112, %c128_113] : memref<8x512xf32, #tpu.memory_space<vmem>>, vector<1x256xf32>
    %234 = vector.broadcast %227 : vector<8x1xf32> to vector<8x256xf32>
    %235 = vector.broadcast %233 : vector<1x256xf32> to vector<8x256xf32>
    %236 = arith.mulf %234, %235 : vector<8x256xf32>
    %237 = arith.addf %129, %236 : vector<8x256xf32>
    %c17 = arith.constant 17 : index
    %c0_114 = arith.constant 0 : index
    %c0_115 = arith.constant 0 : index
    %238 = vector.load %arg1[%c17, %c0_114, %c0_115] : memref<36x8x1xf32, #tpu.memory_space<vmem>>, vector<1x8x1xf32>
    %239 = vector.shape_cast %238 : vector<1x8x1xf32> to vector<8x1xf32>
    %c1_116 = arith.constant 1 : index
    %c128_117 = arith.constant 128 : index
    %240 = vector.load %arg6[%c1_116, %c128_117] : memref<8x512xf32, #tpu.memory_space<vmem>>, vector<1x256xf32>
    %241 = vector.broadcast %239 : vector<8x1xf32> to vector<8x256xf32>
    %242 = vector.broadcast %240 : vector<1x256xf32> to vector<8x256xf32>
    %243 = arith.mulf %241, %242 : vector<8x256xf32>
    %244 = arith.addf %232, %243 : vector<8x256xf32>
    %c5_118 = arith.constant 5 : index
    %c128_119 = arith.constant 128 : index
    %245 = vector.load %arg6[%c5_118, %c128_119] : memref<8x512xf32, #tpu.memory_space<vmem>>, vector<1x256xf32>
    %246 = vector.broadcast %239 : vector<8x1xf32> to vector<8x256xf32>
    %247 = vector.broadcast %245 : vector<1x256xf32> to vector<8x256xf32>
    %248 = arith.mulf %246, %247 : vector<8x256xf32>
    %249 = arith.addf %237, %248 : vector<8x256xf32>
    %c18 = arith.constant 18 : index
    %c0_120 = arith.constant 0 : index
    %c0_121 = arith.constant 0 : index
    %250 = vector.load %arg1[%c18, %c0_120, %c0_121] : memref<36x8x1xf32, #tpu.memory_space<vmem>>, vector<1x8x1xf32>
    %251 = vector.shape_cast %250 : vector<1x8x1xf32> to vector<8x1xf32>
    %c2_122 = arith.constant 2 : index
    %c128_123 = arith.constant 128 : index
    %252 = vector.load %arg6[%c2_122, %c128_123] : memref<8x512xf32, #tpu.memory_space<vmem>>, vector<1x256xf32>
    %253 = vector.broadcast %251 : vector<8x1xf32> to vector<8x256xf32>
    %254 = vector.broadcast %252 : vector<1x256xf32> to vector<8x256xf32>
    %255 = arith.mulf %253, %254 : vector<8x256xf32>
    %256 = arith.addf %244, %255 : vector<8x256xf32>
    %c6_124 = arith.constant 6 : index
    %c128_125 = arith.constant 128 : index
    %257 = vector.load %arg6[%c6_124, %c128_125] : memref<8x512xf32, #tpu.memory_space<vmem>>, vector<1x256xf32>
    %258 = vector.broadcast %251 : vector<8x1xf32> to vector<8x256xf32>
    %259 = vector.broadcast %257 : vector<1x256xf32> to vector<8x256xf32>
    %260 = arith.mulf %258, %259 : vector<8x256xf32>
    %261 = arith.addf %249, %260 : vector<8x256xf32>
    %c19 = arith.constant 19 : index
    %c0_126 = arith.constant 0 : index
    %c0_127 = arith.constant 0 : index
    %262 = vector.load %arg1[%c19, %c0_126, %c0_127] : memref<36x8x1xf32, #tpu.memory_space<vmem>>, vector<1x8x1xf32>
    %263 = vector.shape_cast %262 : vector<1x8x1xf32> to vector<8x1xf32>
    %c3_128 = arith.constant 3 : index
    %c128_129 = arith.constant 128 : index
    %264 = vector.load %arg6[%c3_128, %c128_129] : memref<8x512xf32, #tpu.memory_space<vmem>>, vector<1x256xf32>
    %265 = vector.broadcast %263 : vector<8x1xf32> to vector<8x256xf32>
    %266 = vector.broadcast %264 : vector<1x256xf32> to vector<8x256xf32>
    %267 = arith.mulf %265, %266 : vector<8x256xf32>
    %268 = arith.addf %256, %267 : vector<8x256xf32>
    %c7_130 = arith.constant 7 : index
    %c128_131 = arith.constant 128 : index
    %269 = vector.load %arg6[%c7_130, %c128_131] : memref<8x512xf32, #tpu.memory_space<vmem>>, vector<1x256xf32>
    %270 = vector.broadcast %263 : vector<8x1xf32> to vector<8x256xf32>
    %271 = vector.broadcast %269 : vector<1x256xf32> to vector<8x256xf32>
    %272 = arith.mulf %270, %271 : vector<8x256xf32>
    %273 = arith.addf %261, %272 : vector<8x256xf32>
    %c20 = arith.constant 20 : index
    %c0_132 = arith.constant 0 : index
    %c0_133 = arith.constant 0 : index
    %274 = vector.load %arg1[%c20, %c0_132, %c0_133] : memref<36x8x1xf32, #tpu.memory_space<vmem>>, vector<1x8x1xf32>
    %275 = vector.shape_cast %274 : vector<1x8x1xf32> to vector<8x1xf32>
    %c0_134 = arith.constant 0 : index
    %c129 = arith.constant 129 : index
    %276 = vector.load %arg6[%c0_134, %c129] : memref<8x512xf32, #tpu.memory_space<vmem>>, vector<1x256xf32>
    %277 = vector.broadcast %275 : vector<8x1xf32> to vector<8x256xf32>
    %278 = vector.broadcast %276 : vector<1x256xf32> to vector<8x256xf32>
    %279 = arith.mulf %277, %278 : vector<8x256xf32>
    %280 = arith.addf %172, %279 : vector<8x256xf32>
    %c4_135 = arith.constant 4 : index
    %c129_136 = arith.constant 129 : index
    %281 = vector.load %arg6[%c4_135, %c129_136] : memref<8x512xf32, #tpu.memory_space<vmem>>, vector<1x256xf32>
    %282 = vector.broadcast %275 : vector<8x1xf32> to vector<8x256xf32>
    %283 = vector.broadcast %281 : vector<1x256xf32> to vector<8x256xf32>
    %284 = arith.mulf %282, %283 : vector<8x256xf32>
    %285 = arith.addf %177, %284 : vector<8x256xf32>
    %c21 = arith.constant 21 : index
    %c0_137 = arith.constant 0 : index
    %c0_138 = arith.constant 0 : index
    %286 = vector.load %arg1[%c21, %c0_137, %c0_138] : memref<36x8x1xf32, #tpu.memory_space<vmem>>, vector<1x8x1xf32>
    %287 = vector.shape_cast %286 : vector<1x8x1xf32> to vector<8x1xf32>
    %c1_139 = arith.constant 1 : index
    %c129_140 = arith.constant 129 : index
    %288 = vector.load %arg6[%c1_139, %c129_140] : memref<8x512xf32, #tpu.memory_space<vmem>>, vector<1x256xf32>
    %289 = vector.broadcast %287 : vector<8x1xf32> to vector<8x256xf32>
    %290 = vector.broadcast %288 : vector<1x256xf32> to vector<8x256xf32>
    %291 = arith.mulf %289, %290 : vector<8x256xf32>
    %292 = arith.addf %280, %291 : vector<8x256xf32>
    %c5_141 = arith.constant 5 : index
    %c129_142 = arith.constant 129 : index
    %293 = vector.load %arg6[%c5_141, %c129_142] : memref<8x512xf32, #tpu.memory_space<vmem>>, vector<1x256xf32>
    %294 = vector.broadcast %287 : vector<8x1xf32> to vector<8x256xf32>
    %295 = vector.broadcast %293 : vector<1x256xf32> to vector<8x256xf32>
    %296 = arith.mulf %294, %295 : vector<8x256xf32>
    %297 = arith.addf %285, %296 : vector<8x256xf32>
    %c22 = arith.constant 22 : index
    %c0_143 = arith.constant 0 : index
    %c0_144 = arith.constant 0 : index
    %298 = vector.load %arg1[%c22, %c0_143, %c0_144] : memref<36x8x1xf32, #tpu.memory_space<vmem>>, vector<1x8x1xf32>
    %299 = vector.shape_cast %298 : vector<1x8x1xf32> to vector<8x1xf32>
    %c2_145 = arith.constant 2 : index
    %c129_146 = arith.constant 129 : index
    %300 = vector.load %arg6[%c2_145, %c129_146] : memref<8x512xf32, #tpu.memory_space<vmem>>, vector<1x256xf32>
    %301 = vector.broadcast %299 : vector<8x1xf32> to vector<8x256xf32>
    %302 = vector.broadcast %300 : vector<1x256xf32> to vector<8x256xf32>
    %303 = arith.mulf %301, %302 : vector<8x256xf32>
    %304 = arith.addf %292, %303 : vector<8x256xf32>
    %c6_147 = arith.constant 6 : index
    %c129_148 = arith.constant 129 : index
    %305 = vector.load %arg6[%c6_147, %c129_148] : memref<8x512xf32, #tpu.memory_space<vmem>>, vector<1x256xf32>
    %306 = vector.broadcast %299 : vector<8x1xf32> to vector<8x256xf32>
    %307 = vector.broadcast %305 : vector<1x256xf32> to vector<8x256xf32>
    %308 = arith.mulf %306, %307 : vector<8x256xf32>
    %309 = arith.addf %297, %308 : vector<8x256xf32>
    %c23 = arith.constant 23 : index
    %c0_149 = arith.constant 0 : index
    %c0_150 = arith.constant 0 : index
    %310 = vector.load %arg1[%c23, %c0_149, %c0_150] : memref<36x8x1xf32, #tpu.memory_space<vmem>>, vector<1x8x1xf32>
    %311 = vector.shape_cast %310 : vector<1x8x1xf32> to vector<8x1xf32>
    %c3_151 = arith.constant 3 : index
    %c129_152 = arith.constant 129 : index
    %312 = vector.load %arg6[%c3_151, %c129_152] : memref<8x512xf32, #tpu.memory_space<vmem>>, vector<1x256xf32>
    %313 = vector.broadcast %311 : vector<8x1xf32> to vector<8x256xf32>
    %314 = vector.broadcast %312 : vector<1x256xf32> to vector<8x256xf32>
    %315 = arith.mulf %313, %314 : vector<8x256xf32>
    %316 = arith.addf %304, %315 : vector<8x256xf32>
    %c7_153 = arith.constant 7 : index
    %c129_154 = arith.constant 129 : index
    %317 = vector.load %arg6[%c7_153, %c129_154] : memref<8x512xf32, #tpu.memory_space<vmem>>, vector<1x256xf32>
    %318 = vector.broadcast %311 : vector<8x1xf32> to vector<8x256xf32>
    %319 = vector.broadcast %317 : vector<1x256xf32> to vector<8x256xf32>
    %320 = arith.mulf %318, %319 : vector<8x256xf32>
    %321 = arith.addf %309, %320 : vector<8x256xf32>
    %c24 = arith.constant 24 : index
    %c0_155 = arith.constant 0 : index
    %c0_156 = arith.constant 0 : index
    %322 = vector.load %arg1[%c24, %c0_155, %c0_156] : memref<36x8x1xf32, #tpu.memory_space<vmem>>, vector<1x8x1xf32>
    %323 = vector.shape_cast %322 : vector<1x8x1xf32> to vector<8x1xf32>
    %c0_157 = arith.constant 0 : index
    %c143 = arith.constant 143 : index
    %324 = vector.load %arg6[%c0_157, %c143] : memref<8x512xf32, #tpu.memory_space<vmem>>, vector<1x256xf32>
    %325 = vector.broadcast %323 : vector<8x1xf32> to vector<8x256xf32>
    %326 = vector.broadcast %324 : vector<1x256xf32> to vector<8x256xf32>
    %327 = arith.mulf %325, %326 : vector<8x256xf32>
    %328 = arith.addf %220, %327 : vector<8x256xf32>
    %c4_158 = arith.constant 4 : index
    %c143_159 = arith.constant 143 : index
    %329 = vector.load %arg6[%c4_158, %c143_159] : memref<8x512xf32, #tpu.memory_space<vmem>>, vector<1x256xf32>
    %330 = vector.broadcast %323 : vector<8x1xf32> to vector<8x256xf32>
    %331 = vector.broadcast %329 : vector<1x256xf32> to vector<8x256xf32>
    %332 = arith.mulf %330, %331 : vector<8x256xf32>
    %333 = arith.addf %225, %332 : vector<8x256xf32>
    %c25 = arith.constant 25 : index
    %c0_160 = arith.constant 0 : index
    %c0_161 = arith.constant 0 : index
    %334 = vector.load %arg1[%c25, %c0_160, %c0_161] : memref<36x8x1xf32, #tpu.memory_space<vmem>>, vector<1x8x1xf32>
    %335 = vector.shape_cast %334 : vector<1x8x1xf32> to vector<8x1xf32>
    %c1_162 = arith.constant 1 : index
    %c143_163 = arith.constant 143 : index
    %336 = vector.load %arg6[%c1_162, %c143_163] : memref<8x512xf32, #tpu.memory_space<vmem>>, vector<1x256xf32>
    %337 = vector.broadcast %335 : vector<8x1xf32> to vector<8x256xf32>
    %338 = vector.broadcast %336 : vector<1x256xf32> to vector<8x256xf32>
    %339 = arith.mulf %337, %338 : vector<8x256xf32>
    %340 = arith.addf %328, %339 : vector<8x256xf32>
    %c5_164 = arith.constant 5 : index
    %c143_165 = arith.constant 143 : index
    %341 = vector.load %arg6[%c5_164, %c143_165] : memref<8x512xf32, #tpu.memory_space<vmem>>, vector<1x256xf32>
    %342 = vector.broadcast %335 : vector<8x1xf32> to vector<8x256xf32>
    %343 = vector.broadcast %341 : vector<1x256xf32> to vector<8x256xf32>
    %344 = arith.mulf %342, %343 : vector<8x256xf32>
    %345 = arith.addf %333, %344 : vector<8x256xf32>
    %c26 = arith.constant 26 : index
    %c0_166 = arith.constant 0 : index
    %c0_167 = arith.constant 0 : index
    %346 = vector.load %arg1[%c26, %c0_166, %c0_167] : memref<36x8x1xf32, #tpu.memory_space<vmem>>, vector<1x8x1xf32>
    %347 = vector.shape_cast %346 : vector<1x8x1xf32> to vector<8x1xf32>
    %c2_168 = arith.constant 2 : index
    %c143_169 = arith.constant 143 : index
    %348 = vector.load %arg6[%c2_168, %c143_169] : memref<8x512xf32, #tpu.memory_space<vmem>>, vector<1x256xf32>
    %349 = vector.broadcast %347 : vector<8x1xf32> to vector<8x256xf32>
    %350 = vector.broadcast %348 : vector<1x256xf32> to vector<8x256xf32>
    %351 = arith.mulf %349, %350 : vector<8x256xf32>
    %352 = arith.addf %340, %351 : vector<8x256xf32>
    %c6_170 = arith.constant 6 : index
    %c143_171 = arith.constant 143 : index
    %353 = vector.load %arg6[%c6_170, %c143_171] : memref<8x512xf32, #tpu.memory_space<vmem>>, vector<1x256xf32>
    %354 = vector.broadcast %347 : vector<8x1xf32> to vector<8x256xf32>
    %355 = vector.broadcast %353 : vector<1x256xf32> to vector<8x256xf32>
    %356 = arith.mulf %354, %355 : vector<8x256xf32>
    %357 = arith.addf %345, %356 : vector<8x256xf32>
    %c27 = arith.constant 27 : index
    %c0_172 = arith.constant 0 : index
    %c0_173 = arith.constant 0 : index
    %358 = vector.load %arg1[%c27, %c0_172, %c0_173] : memref<36x8x1xf32, #tpu.memory_space<vmem>>, vector<1x8x1xf32>
    %359 = vector.shape_cast %358 : vector<1x8x1xf32> to vector<8x1xf32>
    %c3_174 = arith.constant 3 : index
    %c143_175 = arith.constant 143 : index
    %360 = vector.load %arg6[%c3_174, %c143_175] : memref<8x512xf32, #tpu.memory_space<vmem>>, vector<1x256xf32>
    %361 = vector.broadcast %359 : vector<8x1xf32> to vector<8x256xf32>
    %362 = vector.broadcast %360 : vector<1x256xf32> to vector<8x256xf32>
    %363 = arith.mulf %361, %362 : vector<8x256xf32>
    %364 = arith.addf %352, %363 : vector<8x256xf32>
    %c7_176 = arith.constant 7 : index
    %c143_177 = arith.constant 143 : index
    %365 = vector.load %arg6[%c7_176, %c143_177] : memref<8x512xf32, #tpu.memory_space<vmem>>, vector<1x256xf32>
    %366 = vector.broadcast %359 : vector<8x1xf32> to vector<8x256xf32>
    %367 = vector.broadcast %365 : vector<1x256xf32> to vector<8x256xf32>
    %368 = arith.mulf %366, %367 : vector<8x256xf32>
    %369 = arith.addf %357, %368 : vector<8x256xf32>
    %c28 = arith.constant 28 : index
    %c0_178 = arith.constant 0 : index
    %c0_179 = arith.constant 0 : index
    %370 = vector.load %arg1[%c28, %c0_178, %c0_179] : memref<36x8x1xf32, #tpu.memory_space<vmem>>, vector<1x8x1xf32>
    %371 = vector.shape_cast %370 : vector<1x8x1xf32> to vector<8x1xf32>
    %c0_180 = arith.constant 0 : index
    %c144 = arith.constant 144 : index
    %372 = vector.load %arg6[%c0_180, %c144] : memref<8x512xf32, #tpu.memory_space<vmem>>, vector<1x256xf32>
    %373 = vector.broadcast %371 : vector<8x1xf32> to vector<8x256xf32>
    %374 = vector.broadcast %372 : vector<1x256xf32> to vector<8x256xf32>
    %375 = arith.mulf %373, %374 : vector<8x256xf32>
    %376 = arith.addf %268, %375 : vector<8x256xf32>
    %c4_181 = arith.constant 4 : index
    %c144_182 = arith.constant 144 : index
    %377 = vector.load %arg6[%c4_181, %c144_182] : memref<8x512xf32, #tpu.memory_space<vmem>>, vector<1x256xf32>
    %378 = vector.broadcast %371 : vector<8x1xf32> to vector<8x256xf32>
    %379 = vector.broadcast %377 : vector<1x256xf32> to vector<8x256xf32>
    %380 = arith.mulf %378, %379 : vector<8x256xf32>
    %381 = arith.addf %273, %380 : vector<8x256xf32>
    %c29 = arith.constant 29 : index
    %c0_183 = arith.constant 0 : index
    %c0_184 = arith.constant 0 : index
    %382 = vector.load %arg1[%c29, %c0_183, %c0_184] : memref<36x8x1xf32, #tpu.memory_space<vmem>>, vector<1x8x1xf32>
    %383 = vector.shape_cast %382 : vector<1x8x1xf32> to vector<8x1xf32>
    %c1_185 = arith.constant 1 : index
    %c144_186 = arith.constant 144 : index
    %384 = vector.load %arg6[%c1_185, %c144_186] : memref<8x512xf32, #tpu.memory_space<vmem>>, vector<1x256xf32>
    %385 = vector.broadcast %383 : vector<8x1xf32> to vector<8x256xf32>
    %386 = vector.broadcast %384 : vector<1x256xf32> to vector<8x256xf32>
    %387 = arith.mulf %385, %386 : vector<8x256xf32>
    %388 = arith.addf %376, %387 : vector<8x256xf32>
    %c5_187 = arith.constant 5 : index
    %c144_188 = arith.constant 144 : index
    %389 = vector.load %arg6[%c5_187, %c144_188] : memref<8x512xf32, #tpu.memory_space<vmem>>, vector<1x256xf32>
    %390 = vector.broadcast %383 : vector<8x1xf32> to vector<8x256xf32>
    %391 = vector.broadcast %389 : vector<1x256xf32> to vector<8x256xf32>
    %392 = arith.mulf %390, %391 : vector<8x256xf32>
    %393 = arith.addf %381, %392 : vector<8x256xf32>
    %c30 = arith.constant 30 : index
    %c0_189 = arith.constant 0 : index
    %c0_190 = arith.constant 0 : index
    %394 = vector.load %arg1[%c30, %c0_189, %c0_190] : memref<36x8x1xf32, #tpu.memory_space<vmem>>, vector<1x8x1xf32>
    %395 = vector.shape_cast %394 : vector<1x8x1xf32> to vector<8x1xf32>
    %c2_191 = arith.constant 2 : index
    %c144_192 = arith.constant 144 : index
    %396 = vector.load %arg6[%c2_191, %c144_192] : memref<8x512xf32, #tpu.memory_space<vmem>>, vector<1x256xf32>
    %397 = vector.broadcast %395 : vector<8x1xf32> to vector<8x256xf32>
    %398 = vector.broadcast %396 : vector<1x256xf32> to vector<8x256xf32>
    %399 = arith.mulf %397, %398 : vector<8x256xf32>
    %400 = arith.addf %388, %399 : vector<8x256xf32>
    %c6_193 = arith.constant 6 : index
    %c144_194 = arith.constant 144 : index
    %401 = vector.load %arg6[%c6_193, %c144_194] : memref<8x512xf32, #tpu.memory_space<vmem>>, vector<1x256xf32>
    %402 = vector.broadcast %395 : vector<8x1xf32> to vector<8x256xf32>
    %403 = vector.broadcast %401 : vector<1x256xf32> to vector<8x256xf32>
    %404 = arith.mulf %402, %403 : vector<8x256xf32>
    %405 = arith.addf %393, %404 : vector<8x256xf32>
    %c31 = arith.constant 31 : index
    %c0_195 = arith.constant 0 : index
    %c0_196 = arith.constant 0 : index
    %406 = vector.load %arg1[%c31, %c0_195, %c0_196] : memref<36x8x1xf32, #tpu.memory_space<vmem>>, vector<1x8x1xf32>
    %407 = vector.shape_cast %406 : vector<1x8x1xf32> to vector<8x1xf32>
    %c3_197 = arith.constant 3 : index
    %c144_198 = arith.constant 144 : index
    %408 = vector.load %arg6[%c3_197, %c144_198] : memref<8x512xf32, #tpu.memory_space<vmem>>, vector<1x256xf32>
    %409 = vector.broadcast %407 : vector<8x1xf32> to vector<8x256xf32>
    %410 = vector.broadcast %408 : vector<1x256xf32> to vector<8x256xf32>
    %411 = arith.mulf %409, %410 : vector<8x256xf32>
    %412 = arith.addf %400, %411 : vector<8x256xf32>
    %c7_199 = arith.constant 7 : index
    %c144_200 = arith.constant 144 : index
    %413 = vector.load %arg6[%c7_199, %c144_200] : memref<8x512xf32, #tpu.memory_space<vmem>>, vector<1x256xf32>
    %414 = vector.broadcast %407 : vector<8x1xf32> to vector<8x256xf32>
    %415 = vector.broadcast %413 : vector<1x256xf32> to vector<8x256xf32>
    %416 = arith.mulf %414, %415 : vector<8x256xf32>
    %417 = arith.addf %405, %416 : vector<8x256xf32>
    %c32 = arith.constant 32 : index
    %c0_201 = arith.constant 0 : index
    %c0_202 = arith.constant 0 : index
    %418 = vector.load %arg1[%c32, %c0_201, %c0_202] : memref<36x8x1xf32, #tpu.memory_space<vmem>>, vector<1x8x1xf32>
    %419 = vector.shape_cast %418 : vector<1x8x1xf32> to vector<8x1xf32>
    %c0_203 = arith.constant 0 : index
    %c145 = arith.constant 145 : index
    %420 = vector.load %arg6[%c0_203, %c145] : memref<8x512xf32, #tpu.memory_space<vmem>>, vector<1x256xf32>
    %421 = vector.broadcast %419 : vector<8x1xf32> to vector<8x256xf32>
    %422 = vector.broadcast %420 : vector<1x256xf32> to vector<8x256xf32>
    %423 = arith.mulf %421, %422 : vector<8x256xf32>
    %424 = arith.addf %316, %423 : vector<8x256xf32>
    %c4_204 = arith.constant 4 : index
    %c145_205 = arith.constant 145 : index
    %425 = vector.load %arg6[%c4_204, %c145_205] : memref<8x512xf32, #tpu.memory_space<vmem>>, vector<1x256xf32>
    %426 = vector.broadcast %419 : vector<8x1xf32> to vector<8x256xf32>
    %427 = vector.broadcast %425 : vector<1x256xf32> to vector<8x256xf32>
    %428 = arith.mulf %426, %427 : vector<8x256xf32>
    %429 = arith.addf %321, %428 : vector<8x256xf32>
    %c33 = arith.constant 33 : index
    %c0_206 = arith.constant 0 : index
    %c0_207 = arith.constant 0 : index
    %430 = vector.load %arg1[%c33, %c0_206, %c0_207] : memref<36x8x1xf32, #tpu.memory_space<vmem>>, vector<1x8x1xf32>
    %431 = vector.shape_cast %430 : vector<1x8x1xf32> to vector<8x1xf32>
    %c1_208 = arith.constant 1 : index
    %c145_209 = arith.constant 145 : index
    %432 = vector.load %arg6[%c1_208, %c145_209] : memref<8x512xf32, #tpu.memory_space<vmem>>, vector<1x256xf32>
    %433 = vector.broadcast %431 : vector<8x1xf32> to vector<8x256xf32>
    %434 = vector.broadcast %432 : vector<1x256xf32> to vector<8x256xf32>
    %435 = arith.mulf %433, %434 : vector<8x256xf32>
    %436 = arith.addf %424, %435 : vector<8x256xf32>
    %c5_210 = arith.constant 5 : index
    %c145_211 = arith.constant 145 : index
    %437 = vector.load %arg6[%c5_210, %c145_211] : memref<8x512xf32, #tpu.memory_space<vmem>>, vector<1x256xf32>
    %438 = vector.broadcast %431 : vector<8x1xf32> to vector<8x256xf32>
    %439 = vector.broadcast %437 : vector<1x256xf32> to vector<8x256xf32>
    %440 = arith.mulf %438, %439 : vector<8x256xf32>
    %441 = arith.addf %429, %440 : vector<8x256xf32>
    %c34 = arith.constant 34 : index
    %c0_212 = arith.constant 0 : index
    %c0_213 = arith.constant 0 : index
    %442 = vector.load %arg1[%c34, %c0_212, %c0_213] : memref<36x8x1xf32, #tpu.memory_space<vmem>>, vector<1x8x1xf32>
    %443 = vector.shape_cast %442 : vector<1x8x1xf32> to vector<8x1xf32>
    %c2_214 = arith.constant 2 : index
    %c145_215 = arith.constant 145 : index
    %444 = vector.load %arg6[%c2_214, %c145_215] : memref<8x512xf32, #tpu.memory_space<vmem>>, vector<1x256xf32>
    %445 = vector.broadcast %443 : vector<8x1xf32> to vector<8x256xf32>
    %446 = vector.broadcast %444 : vector<1x256xf32> to vector<8x256xf32>
    %447 = arith.mulf %445, %446 : vector<8x256xf32>
    %448 = arith.addf %436, %447 : vector<8x256xf32>
    %c6_216 = arith.constant 6 : index
    %c145_217 = arith.constant 145 : index
    %449 = vector.load %arg6[%c6_216, %c145_217] : memref<8x512xf32, #tpu.memory_space<vmem>>, vector<1x256xf32>
    %450 = vector.broadcast %443 : vector<8x1xf32> to vector<8x256xf32>
    %451 = vector.broadcast %449 : vector<1x256xf32> to vector<8x256xf32>
    %452 = arith.mulf %450, %451 : vector<8x256xf32>
    %453 = arith.addf %441, %452 : vector<8x256xf32>
    %c35 = arith.constant 35 : index
    %c0_218 = arith.constant 0 : index
    %c0_219 = arith.constant 0 : index
    %454 = vector.load %arg1[%c35, %c0_218, %c0_219] : memref<36x8x1xf32, #tpu.memory_space<vmem>>, vector<1x8x1xf32>
    %455 = vector.shape_cast %454 : vector<1x8x1xf32> to vector<8x1xf32>
    %c3_220 = arith.constant 3 : index
    %c145_221 = arith.constant 145 : index
    %456 = vector.load %arg6[%c3_220, %c145_221] : memref<8x512xf32, #tpu.memory_space<vmem>>, vector<1x256xf32>
    %457 = vector.broadcast %455 : vector<8x1xf32> to vector<8x256xf32>
    %458 = vector.broadcast %456 : vector<1x256xf32> to vector<8x256xf32>
    %459 = arith.mulf %457, %458 : vector<8x256xf32>
    %460 = arith.addf %448, %459 : vector<8x256xf32>
    %c7_222 = arith.constant 7 : index
    %c145_223 = arith.constant 145 : index
    %461 = vector.load %arg6[%c7_222, %c145_223] : memref<8x512xf32, #tpu.memory_space<vmem>>, vector<1x256xf32>
    %462 = vector.broadcast %455 : vector<8x1xf32> to vector<8x256xf32>
    %463 = vector.broadcast %461 : vector<1x256xf32> to vector<8x256xf32>
    %464 = arith.mulf %462, %463 : vector<8x256xf32>
    %465 = arith.addf %453, %464 : vector<8x256xf32>
    %cst_224 = arith.constant 0.000000e+00 : f32
    %466 = vector.shape_cast %24 : vector<1x256xi1> to vector<1x256xi1>
    %467 = vector.broadcast %466 : vector<1x256xi1> to vector<8x256xi1>
    %468 = vector.broadcast %cst_224 : f32 to vector<8x256xf32>
    %469 = arith.select %467, %364, %468 : vector<8x256xi1>, vector<8x256xf32>
    %470 = arith.addf %412, %469 : vector<8x256xf32>
    %cst_225 = arith.constant 0.000000e+00 : f32
    %471 = vector.shape_cast %26 : vector<1x256xi1> to vector<1x256xi1>
    %472 = vector.broadcast %471 : vector<1x256xi1> to vector<8x256xi1>
    %473 = vector.broadcast %cst_225 : f32 to vector<8x256xf32>
    %474 = arith.select %472, %460, %473 : vector<8x256xi1>, vector<8x256xf32>
    %475 = arith.addf %470, %474 : vector<8x256xf32>
    %cst_226 = arith.constant 0.000000e+00 : f32
    %476 = vector.broadcast %cst_226 : f32 to vector<8x256xf32>
    %477 = arith.maximumf %475, %476 : vector<8x256xf32>
    %c0_227 = arith.constant 0 : index
    %c0_228 = arith.constant 0 : index
    %478 = vector.load %arg3[%c0_227, %c0_228] : memref<8x1xf32, #tpu.memory_space<vmem>>, vector<8x1xf32>
    %479 = vector.broadcast %478 : vector<8x1xf32> to vector<8x256xf32>
    %480 = arith.mulf %479, %477 : vector<8x256xf32>
    %cst_229 = arith.constant dense<0.000000e+00> : vector<256xf32>
    %481 = vector.multi_reduction <add>, %480, %cst_229 [0] : vector<8x256xf32> to vector<256xf32>
    %482 = vector.shape_cast %481 : vector<256xf32> to vector<1x256xf32>
    %c0_230 = arith.constant 0 : index
    %483 = memref.load %arg4[%c0_230] : memref<1xf32, #tpu.memory_space<smem>>
    %484 = vector.broadcast %483 : f32 to vector<1x256xf32>
    %485 = arith.addf %482, %484 : vector<1x256xf32>
    %cst_231 = arith.constant 0.000000e+00 : f32
    %486 = vector.shape_cast %24 : vector<1x256xi1> to vector<1x256xi1>
    %487 = vector.broadcast %486 : vector<1x256xi1> to vector<8x256xi1>
    %488 = vector.broadcast %cst_231 : f32 to vector<8x256xf32>
    %489 = arith.select %487, %369, %488 : vector<8x256xi1>, vector<8x256xf32>
    %490 = arith.addf %417, %489 : vector<8x256xf32>
    %cst_232 = arith.constant 0.000000e+00 : f32
    %491 = vector.shape_cast %26 : vector<1x256xi1> to vector<1x256xi1>
    %492 = vector.broadcast %491 : vector<1x256xi1> to vector<8x256xi1>
    %493 = vector.broadcast %cst_232 : f32 to vector<8x256xf32>
    %494 = arith.select %492, %465, %493 : vector<8x256xi1>, vector<8x256xf32>
    %495 = arith.addf %490, %494 : vector<8x256xf32>
    %cst_233 = arith.constant 0.000000e+00 : f32
    %496 = vector.broadcast %cst_233 : f32 to vector<8x256xf32>
    %497 = arith.maximumf %495, %496 : vector<8x256xf32>
    %c0_234 = arith.constant 0 : index
    %c0_235 = arith.constant 0 : index
    %498 = vector.load %arg3[%c0_234, %c0_235] : memref<8x1xf32, #tpu.memory_space<vmem>>, vector<8x1xf32>
    %499 = vector.broadcast %498 : vector<8x1xf32> to vector<8x256xf32>
    %500 = arith.mulf %499, %497 : vector<8x256xf32>
    %cst_236 = arith.constant dense<0.000000e+00> : vector<256xf32>
    %501 = vector.multi_reduction <add>, %500, %cst_236 [0] : vector<8x256xf32> to vector<256xf32>
    %502 = vector.shape_cast %501 : vector<256xf32> to vector<1x256xf32>
    %c0_237 = arith.constant 0 : index
    %503 = memref.load %arg4[%c0_237] : memref<1xf32, #tpu.memory_space<smem>>
    %504 = vector.broadcast %503 : f32 to vector<1x256xf32>
    %505 = arith.addf %502, %504 : vector<1x256xf32>
    %506 = tpu.concatenate %485, %505 in 0 : vector<1x256xf32>, vector<1x256xf32> -> vector<2x256xf32>
    %c0_238 = arith.constant 0 : index
    %c0_239 = arith.constant 0 : index
    %507 = vector.load %arg5[%c0_238, %c0_239] : memref<2x256xf32, #tpu.memory_space<vmem>>, vector<2x256xf32>
    tpu.vector_store %arg5[%c0_238, %c0_239], %506 {strides = array<i32>} : memref<2x256xf32, #tpu.memory_space<vmem>>, vector<2x256xf32>,
    return
  }
}

</mosaic_0001>

<llo_original>
// kernel: combined_model.1
$region0: #{combined_model.1}
  #allocation0 [shape = 'u32[]', space=smem, size = 0x4, offset = 0x4, fixed_abs, tag = 'smem constant byte address 0x4 - core index']
  #allocation1 [shape = 'u32[144,128]{1,0:T(1,128)}', space=vmem, size = 0x12000, scoped, tag = 'internal scratch']
  #allocation2 [shape = 'f32[8,512]{1,0:T(8,128)}', space=vmem, size = 0x4000, scoped, tag = 'scratch operand']
  #allocation3 [shape = 'f32[1]{0:T(128)S(6)}', space=smem, size = 0x200, scoped, tag = 'scoped memory for combined_model.1']
  %s0 = inlined_call_operand.vmem [shape: f32[8,256], index: 0, kind: input, shape index: {}]
  %s1 = inlined_call_operand.vmem [shape: f32[36,8,1], index: 1, kind: input, shape index: {}]
  %s2 = inlined_call_operand.vmem [shape: f32[8,1], index: 2, kind: input, shape index: {}]
  %s3 = inlined_call_operand.vmem [shape: f32[8,1], index: 3, kind: input, shape index: {}]
  %s4 = inlined_call_operand.<no memory space> [shape: f32[1], index: 4, kind: input, shape index: {}]
  %s5 = inlined_call_operand.vmem [shape: f32[2,256], index: 5, kind: output, shape index: {}]
  %s6 = sld [smem:[#allocation0]]
  $region30: #{combined_model.1} parent=0
    _
  %s8 = ssub.s32 1, %s6
  %s9 = scalar_select 0, %s8, %s6
  %10 = sst [smem:[#allocation3]] %s4
  // Predicated region
  $region2: #{combined_model.1} parent=0 // pred_check
    _
  $region3: #{combined_model.1} parent=0 // pred_check_branch
    %12 = sbr.rel (0) target = $region5
  $region4: #{combined_model.1} parent=0 // pred_region
    _
  $region5: #{combined_model.1} parent=0 // pred_fallthru
    _
  // Predicated region
  $region6: #{combined_model.1} parent=0 // pred_check
    _
  $region7: #{combined_model.1} parent=0 // pred_check_branch
    %14 = sbr.rel (0) target = $region9
  $region8: #{combined_model.1} parent=0 // pred_region
    _
  $region9: #{combined_model.1} parent=0 // pred_fallthru
    _
  // Predicated region
  $region10: #{combined_model.1} parent=0 // pred_check
    _
  $region11: #{combined_model.1} parent=0 // pred_check_branch
    %16 = sbr.rel (0) target = $region13
  $region12: #{combined_model.1} parent=0 // pred_region
    _
  $region13: #{combined_model.1} parent=0 // pred_fallthru
    _
  // Predicated region
  $region14: #{combined_model.1} parent=0 // pred_check
    _
  $region15: #{combined_model.1} parent=0 // pred_check_branch
    %18 = sbr.rel (0) target = $region17
  $region16: #{combined_model.1} parent=0 // pred_region
    _
  $region17: #{combined_model.1} parent=0 // pred_fallthru
    _
  // Predicated region
  $region18: #{combined_model.1} parent=0 // pred_check
    _
  $region19: #{combined_model.1} parent=0 // pred_check_branch
    %20 = sbr.rel (0) target = $region21
  $region20: #{combined_model.1} parent=0 // pred_region
    _
  $region21: #{combined_model.1} parent=0 // pred_fallthru
    _
  %21 = vst [vmem:[#allocation2] sm:$0xff] 0.0
  %22 = vst [vmem:[#allocation2 + $0x18] sm:$0xff] 0.0
  %v23 = vld [vmem:[%s0] sm:$0xff]
  %v24 = vld [vmem:[%s0 + $0x8] sm:$0xff]
  %25 = vst [vmem:[#allocation2 + $0x8] sm:$0xff] %v23
  %26 = vst [vmem:[#allocation2 + $0x10] sm:$0xff] %v24
  %v27 = vlaneseq
  %v28 = vand.u32 %v27, 127
  %v29 = vadd.s32 %v28, 128
  %vm30 = vcmp.lt.s32.totalorder %v28, 0
  %v31 = vsub.s32 0, %v28
  %v32 = vsel %vm30, %v31, %v28
  %v33 = vshrl.u32 %v32, 4
  %v34 = vand.u32 %v32, 15
  %v35 = vsub.s32 0, %v34
  %v36 = vsel %vm30, %v35, %v34
  %vm37 = vcmp.lt.s32.totalorder %v29, 0
  %v38 = vsub.s32 0, %v29
  %v39 = vsel %vm37, %v38, %v29
  %v40 = vshrl.u32 %v39, 4
  %v41 = vand.u32 %v39, 15
  %v42 = vsub.s32 0, %v41
  %v43 = vsel %vm37, %v42, %v41
  %vm44 = vcmp.ne.s32.totalorder %v36, 0
  %vm45 = vcmp.ne.s32.totalorder %v43, 0
  %vm46 = vcmp.lt.s32.totalorder %v36, 0
  %vm47 = vcmp.lt.s32.totalorder %v43, 0
  %vm48 = vmand %vm46, %vm44
  %vm49 = vmand %vm47, %vm45
  %v50 = vadd.s32 %v36, 16
  %v51 = vadd.s32 %v43, 16
  %v52 = vsel %vm48, %v50, %v36
  %v53 = vsel %vm49, %v51, %v43
  %vm54 = vcmp.ge.s32.totalorder %v52, 1
  %vm55 = vcmp.ge.s32.totalorder %v53, 1
  %vm56 = vcmp.le.s32.totalorder %v52, 14
  %vm57 = vcmp.le.s32.totalorder %v53, 14
  %v58 = vld [vmem:[%s2] sm:$0xff]
  %60 = vset.pattern.permute.xlu0 0
  %61 = vperm.xlu0 %60, %v58
  %v62 = vpop.permute.xlu0 %61
  %v64 = vld [vmem:[%s1] sm:$0xff]
  %v65 = vld [vmem:[#allocation2] ss:$8 sm:$0x7]
  %67 = vset.pattern.permute.xlu0 0
  %68 = vperm.xlu0 %67, %v64
  %v69 = vpop.permute.xlu0 %68
  %v72 = vlaneseq
  %v73 = vshrl.u32 %v72, 7
  %v74 = vsub.s32 0, %v73
  %v75 = vrot.slane %v65, %v74
  %v76 = vlaneseq
  %v77 = vshrl.u32 %v76, 7
  %v78 = vsub.s32 1, %v77
  %v79 = vrot.slane %v65, %v78
  %v80 = vlaneseq
  %v81 = vshrl.u32 %v80, 7
  %v82 = vsub.s32 2, %v81
  %v83 = vrot.slane %v65, %v82
  %v87 = vmul.f32 %v69, %v75
  %v88 = vmul.f32 %v69, %v79
  %v89 = vmul.f32 %v69, %v83
  %v90 = vadd.f32 %v87, 0.0
  %v91 = vadd.f32 %v88, 0.0
  %v92 = vadd.f32 %v89, 0.0
  %s93 = scalar_lea.vmem [#allocation2], 4
  %v94 = vld [vmem:[%s93] ss:$8 sm:$0x7]
  %v96 = vlaneseq
  %v97 = vshrl.u32 %v96, 7
  %v98 = vsub.s32 0, %v97
  %v99 = vrot.slane %v94, %v98
  %v100 = vlaneseq
  %v101 = vshrl.u32 %v100, 7
  %v102 = vsub.s32 1, %v101
  %v103 = vrot.slane %v94, %v102
  %v104 = vlaneseq
  %v105 = vshrl.u32 %v104, 7
  %v106 = vsub.s32 2, %v105
  %v107 = vrot.slane %v94, %v106
  %v111 = vmul.f32 %v69, %v99
  %v112 = vmul.f32 %v69, %v103
  %v113 = vmul.f32 %v69, %v107
  %v114 = vadd.f32 %v111, 0.0
  %v115 = vadd.f32 %v112, 0.0
  %v116 = vadd.f32 %v113, 0.0
  %s117 = scalar_lea.vmem %s1, 8
  %v118 = vld [vmem:[%s117] sm:$0xff]
  %s119 = scalar_lea.vmem [#allocation2], 1
  %v120 = vld [vmem:[%s119] ss:$8 sm:$0x7]
  %122 = vset.pattern.permute.xlu0 0
  %123 = vperm.xlu0 %122, %v118
  %v124 = vpop.permute.xlu0 %123
  %v127 = vlaneseq
  %v128 = vshrl.u32 %v127, 7
  %v129 = vsub.s32 0, %v128
  %v130 = vrot.slane %v120, %v129
  %v131 = vlaneseq
  %v132 = vshrl.u32 %v131, 7
  %v133 = vsub.s32 1, %v132
  %v134 = vrot.slane %v120, %v133
  %v135 = vlaneseq
  %v136 = vshrl.u32 %v135, 7
  %v137 = vsub.s32 2, %v136
  %v138 = vrot.slane %v120, %v137
  %v142 = vmul.f32 %v124, %v130
  %v143 = vmul.f32 %v124, %v134
  %v144 = vmul.f32 %v124, %v138
  %v145 = vadd.f32 %v90, %v142
  %v146 = vadd.f32 %v91, %v143
  %v147 = vadd.f32 %v92, %v144
  %s148 = scalar_lea.vmem [#allocation2], 5
  %v149 = vld [vmem:[%s148] ss:$8 sm:$0x7]
  %v151 = vlaneseq
  %v152 = vshrl.u32 %v151, 7
  %v153 = vsub.s32 0, %v152
  %v154 = vrot.slane %v149, %v153
  %v155 = vlaneseq
  %v156 = vshrl.u32 %v155, 7
  %v157 = vsub.s32 1, %v156
  %v158 = vrot.slane %v149, %v157
  %v159 = vlaneseq
  %v160 = vshrl.u32 %v159, 7
  %v161 = vsub.s32 2, %v160
  %v162 = vrot.slane %v149, %v161
  %v166 = vmul.f32 %v124, %v154
  %v167 = vmul.f32 %v124, %v158
  %v168 = vmul.f32 %v124, %v162
  %v169 = vadd.f32 %v114, %v166
  %v170 = vadd.f32 %v115, %v167
  %v171 = vadd.f32 %v116, %v168
  %s172 = scalar_lea.vmem %s1, 16
  %v173 = vld [vmem:[%s172] sm:$0xff]
  %s174 = scalar_lea.vmem [#allocation2], 2
  %v175 = vld [vmem:[%s174] ss:$8 sm:$0x7]
  %177 = vset.pattern.permute.xlu0 0
  %178 = vperm.xlu0 %177, %v173
  %v179 = vpop.permute.xlu0 %178
  %v182 = vlaneseq
  %v183 = vshrl.u32 %v182, 7
  %v184 = vsub.s32 0, %v183
  %v185 = vrot.slane %v175, %v184
  %v186 = vlaneseq
  %v187 = vshrl.u32 %v186, 7
  %v188 = vsub.s32 1, %v187
  %v189 = vrot.slane %v175, %v188
  %v190 = vlaneseq
  %v191 = vshrl.u32 %v190, 7
  %v192 = vsub.s32 2, %v191
  %v193 = vrot.slane %v175, %v192
  %v197 = vmul.f32 %v179, %v185
  %v198 = vmul.f32 %v179, %v189
  %v199 = vmul.f32 %v179, %v193
  %v200 = vadd.f32 %v145, %v197
  %v201 = vadd.f32 %v146, %v198
  %v202 = vadd.f32 %v147, %v199
  %s203 = scalar_lea.vmem [#allocation2], 6
  %v204 = vld [vmem:[%s203] ss:$8 sm:$0x7]
  %v206 = vlaneseq
  %v207 = vshrl.u32 %v206, 7
  %v208 = vsub.s32 0, %v207
  %v209 = vrot.slane %v204, %v208
  %v210 = vlaneseq
  %v211 = vshrl.u32 %v210, 7
  %v212 = vsub.s32 1, %v211
  %v213 = vrot.slane %v204, %v212
  %v214 = vlaneseq
  %v215 = vshrl.u32 %v214, 7
  %v216 = vsub.s32 2, %v215
  %v217 = vrot.slane %v204, %v216
  %v221 = vmul.f32 %v179, %v209
  %v222 = vmul.f32 %v179, %v213
  %v223 = vmul.f32 %v179, %v217
  %v224 = vadd.f32 %v169, %v221
  %v225 = vadd.f32 %v170, %v222
  %v226 = vadd.f32 %v171, %v223
  %s227 = scalar_lea.vmem %s1, 24
  %v228 = vld [vmem:[%s227] sm:$0xff]
  %s229 = scalar_lea.vmem [#allocation2], 3
  %v230 = vld [vmem:[%s229] ss:$8 sm:$0x7]
  %232 = vset.pattern.permute.xlu0 0
  %233 = vperm.xlu0 %232, %v228
  %v234 = vpop.permute.xlu0 %233
  %v237 = vlaneseq
  %v238 = vshrl.u32 %v237, 7
  %v239 = vsub.s32 0, %v238
  %v240 = vrot.slane %v230, %v239
  %v241 = vlaneseq
  %v242 = vshrl.u32 %v241, 7
  %v243 = vsub.s32 1, %v242
  %v244 = vrot.slane %v230, %v243
  %v245 = vlaneseq
  %v246 = vshrl.u32 %v245, 7
  %v247 = vsub.s32 2, %v246
  %v248 = vrot.slane %v230, %v247
  %v252 = vmul.f32 %v234, %v240
  %v253 = vmul.f32 %v234, %v244
  %v254 = vmul.f32 %v234, %v248
  %v255 = vadd.f32 %v200, %v252
  %v256 = vadd.f32 %v201, %v253
  %v257 = vadd.f32 %v202, %v254
  %s258 = scalar_lea.vmem [#allocation2], 7
  %v259 = vld [vmem:[%s258] ss:$8 sm:$0x7]
  %v261 = vlaneseq
  %v262 = vshrl.u32 %v261, 7
  %v263 = vsub.s32 0, %v262
  %v264 = vrot.slane %v259, %v263
  %v265 = vlaneseq
  %v266 = vshrl.u32 %v265, 7
  %v267 = vsub.s32 1, %v266
  %v268 = vrot.slane %v259, %v267
  %v269 = vlaneseq
  %v270 = vshrl.u32 %v269, 7
  %v271 = vsub.s32 2, %v270
  %v272 = vrot.slane %v259, %v271
  %v276 = vmul.f32 %v234, %v264
  %v277 = vmul.f32 %v234, %v268
  %v278 = vmul.f32 %v234, %v272
  %v279 = vadd.f32 %v224, %v276
  %v280 = vadd.f32 %v225, %v277
  %v281 = vadd.f32 %v226, %v278
  %s282 = scalar_lea.vmem %s1, 32
  %v283 = vld [vmem:[%s282] sm:$0xff]
  %285 = vset.pattern.permute.xlu0 0
  %286 = vperm.xlu0 %285, %v283
  %v287 = vpop.permute.xlu0 %286
  %v289 = vmul.f32 %v287, %v75
  %v290 = vmul.f32 %v287, %v79
  %v291 = vmul.f32 %v287, %v83
  %v292 = vadd.f32 %v62, %v289
  %v293 = vadd.f32 %v62, %v290
  %v294 = vadd.f32 %v62, %v291
  %v295 = vmul.f32 %v287, %v99
  %v296 = vmul.f32 %v287, %v103
  %v297 = vmul.f32 %v287, %v107
  %v298 = vadd.f32 %v62, %v295
  %v299 = vadd.f32 %v62, %v296
  %v300 = vadd.f32 %v62, %v297
  %s301 = scalar_lea.vmem %s1, 40
  %v302 = vld [vmem:[%s301] sm:$0xff]
  %304 = vset.pattern.permute.xlu0 0
  %305 = vperm.xlu0 %304, %v302
  %v306 = vpop.permute.xlu0 %305
  %v308 = vmul.f32 %v306, %v130
  %v309 = vmul.f32 %v306, %v134
  %v310 = vmul.f32 %v306, %v138
  %v311 = vadd.f32 %v292, %v308
  %v312 = vadd.f32 %v293, %v309
  %v313 = vadd.f32 %v294, %v310
  %v314 = vmul.f32 %v306, %v154
  %v315 = vmul.f32 %v306, %v158
  %v316 = vmul.f32 %v306, %v162
  %v317 = vadd.f32 %v298, %v314
  %v318 = vadd.f32 %v299, %v315
  %v319 = vadd.f32 %v300, %v316
  %s320 = scalar_lea.vmem %s1, 48
  %v321 = vld [vmem:[%s320] sm:$0xff]
  %323 = vset.pattern.permute.xlu0 0
  %324 = vperm.xlu0 %323, %v321
  %v325 = vpop.permute.xlu0 %324
  %v327 = vmul.f32 %v325, %v185
  %v328 = vmul.f32 %v325, %v189
  %v329 = vmul.f32 %v325, %v193
  %v330 = vadd.f32 %v311, %v327
  %v331 = vadd.f32 %v312, %v328
  %v332 = vadd.f32 %v313, %v329
  %v333 = vmul.f32 %v325, %v209
  %v334 = vmul.f32 %v325, %v213
  %v335 = vmul.f32 %v325, %v217
  %v336 = vadd.f32 %v317, %v333
  %v337 = vadd.f32 %v318, %v334
  %v338 = vadd.f32 %v319, %v335
  %s339 = scalar_lea.vmem %s1, 56
  %v340 = vld [vmem:[%s339] sm:$0xff]
  %342 = vset.pattern.permute.xlu0 0
  %343 = vperm.xlu0 %342, %v340
  %v344 = vpop.permute.xlu0 %343
  %v346 = vmul.f32 %v344, %v240
  %v347 = vmul.f32 %v344, %v244
  %v348 = vmul.f32 %v344, %v248
  %v349 = vadd.f32 %v330, %v346
  %v350 = vadd.f32 %v331, %v347
  %v351 = vadd.f32 %v332, %v348
  %v352 = vmul.f32 %v344, %v264
  %v353 = vmul.f32 %v344, %v268
  %v354 = vmul.f32 %v344, %v272
  %v355 = vadd.f32 %v336, %v352
  %v356 = vadd.f32 %v337, %v353
  %v357 = vadd.f32 %v338, %v354
  %s358 = scalar_lea.vmem %s1, 64
  %v359 = vld [vmem:[%s358] sm:$0xff]
  %361 = vset.pattern.permute.xlu0 0
  %362 = vperm.xlu0 %361, %v359
  %v363 = vpop.permute.xlu0 %362
  %v365 = vmul.f32 %v363, %v75
  %v366 = vmul.f32 %v363, %v79
  %v367 = vmul.f32 %v363, %v83
  %v368 = vadd.f32 %v365, 0.0
  %v369 = vadd.f32 %v366, 0.0
  %v370 = vadd.f32 %v367, 0.0
  %v371 = vmul.f32 %v363, %v99
  %v372 = vmul.f32 %v363, %v103
  %v373 = vmul.f32 %v363, %v107
  %v374 = vadd.f32 %v371, 0.0
  %v375 = vadd.f32 %v372, 0.0
  %v376 = vadd.f32 %v373, 0.0
  %s377 = scalar_lea.vmem %s1, 72
  %v378 = vld [vmem:[%s377] sm:$0xff]
  %380 = vset.pattern.permute.xlu0 0
  %381 = vperm.xlu0 %380, %v378
  %v382 = vpop.permute.xlu0 %381
  %v384 = vmul.f32 %v382, %v130
  %v385 = vmul.f32 %v382, %v134
  %v386 = vmul.f32 %v382, %v138
  %v387 = vadd.f32 %v368, %v384
  %v388 = vadd.f32 %v369, %v385
  %v389 = vadd.f32 %v370, %v386
  %v390 = vmul.f32 %v382, %v154
  %v391 = vmul.f32 %v382, %v158
  %v392 = vmul.f32 %v382, %v162
  %v393 = vadd.f32 %v374, %v390
  %v394 = vadd.f32 %v375, %v391
  %v395 = vadd.f32 %v376, %v392
  %s396 = scalar_lea.vmem %s1, 80
  %v397 = vld [vmem:[%s396] sm:$0xff]
  %399 = vset.pattern.permute.xlu0 0
  %400 = vperm.xlu0 %399, %v397
  %v401 = vpop.permute.xlu0 %400
  %v403 = vmul.f32 %v401, %v185
  %v404 = vmul.f32 %v401, %v189
  %v405 = vmul.f32 %v401, %v193
  %v406 = vadd.f32 %v387, %v403
  %v407 = vadd.f32 %v388, %v404
  %v408 = vadd.f32 %v389, %v405
  %v409 = vmul.f32 %v401, %v209
  %v410 = vmul.f32 %v401, %v213
  %v411 = vmul.f32 %v401, %v217
  %v412 = vadd.f32 %v393, %v409
  %v413 = vadd.f32 %v394, %v410
  %v414 = vadd.f32 %v395, %v411
  %s415 = scalar_lea.vmem %s1, 88
  %v416 = vld [vmem:[%s415] sm:$0xff]
  %418 = vset.pattern.permute.xlu0 0
  %419 = vperm.xlu0 %418, %v416
  %v420 = vpop.permute.xlu0 %419
  %v422 = vmul.f32 %v420, %v240
  %v423 = vmul.f32 %v420, %v244
  %v424 = vmul.f32 %v420, %v248
  %v425 = vadd.f32 %v406, %v422
  %v426 = vadd.f32 %v407, %v423
  %v427 = vadd.f32 %v408, %v424
  %v428 = vmul.f32 %v420, %v264
  %v429 = vmul.f32 %v420, %v268
  %v430 = vmul.f32 %v420, %v272
  %v431 = vadd.f32 %v412, %v428
  %v432 = vadd.f32 %v413, %v429
  %v433 = vadd.f32 %v414, %v430
  %s434 = scalar_lea.vmem %s1, 96
  %v435 = vld [vmem:[%s434] sm:$0xff]
  %437 = vset.pattern.permute.xlu0 0
  %438 = vperm.xlu0 %437, %v435
  %v439 = vpop.permute.xlu0 %438
  %v441 = vmul.f32 %v439, %v75
  %v442 = vmul.f32 %v439, %v79
  %v443 = vmul.f32 %v439, %v83
  %447 = vrot.lane.b32.xlu0 %v441, 112
  %v448 = vpop.permute.xlu0 %447
  %449 = vrot.lane.b32.xlu0 %v442, 112
  %v450 = vpop.permute.xlu0 %449
  %451 = vrot.lane.b32.xlu0 %v443, 112
  %v452 = vpop.permute.xlu0 %451
  %vm453 = vcmask 916480
  %v454 = vsel %vm453, %v448, %v450
  %v455 = vsel %vm453, %v450, %v452
  %v459 = vadd.f32 %v255, %v454
  %v460 = vadd.f32 %v256, %v455
  %v461 = vadd.f32 %v257, %v452
  %v462 = vmul.f32 %v439, %v99
  %v463 = vmul.f32 %v439, %v103
  %v464 = vmul.f32 %v439, %v107
  %468 = vrot.lane.b32.xlu0 %v462, 112
  %v469 = vpop.permute.xlu0 %468
  %470 = vrot.lane.b32.xlu0 %v463, 112
  %v471 = vpop.permute.xlu0 %470
  %472 = vrot.lane.b32.xlu0 %v464, 112
  %v473 = vpop.permute.xlu0 %472
  %v474 = vsel %vm453, %v469, %v471
  %v475 = vsel %vm453, %v471, %v473
  %v479 = vadd.f32 %v279, %v474
  %v480 = vadd.f32 %v280, %v475
  %v481 = vadd.f32 %v281, %v473
  %s482 = scalar_lea.vmem %s1, 104
  %v483 = vld [vmem:[%s482] sm:$0xff]
  %485 = vset.pattern.permute.xlu0 0
  %486 = vperm.xlu0 %485, %v483
  %v487 = vpop.permute.xlu0 %486
  %v489 = vmul.f32 %v487, %v130
  %v490 = vmul.f32 %v487, %v134
  %v491 = vmul.f32 %v487, %v138
  %495 = vrot.lane.b32.xlu0 %v489, 112
  %v496 = vpop.permute.xlu0 %495
  %497 = vrot.lane.b32.xlu0 %v490, 112
  %v498 = vpop.permute.xlu0 %497
  %499 = vrot.lane.b32.xlu0 %v491, 112
  %v500 = vpop.permute.xlu0 %499
  %v501 = vsel %vm453, %v496, %v498
  %v502 = vsel %vm453, %v498, %v500
  %v506 = vadd.f32 %v459, %v501
  %v507 = vadd.f32 %v460, %v502
  %v508 = vadd.f32 %v461, %v500
  %v509 = vmul.f32 %v487, %v154
  %v510 = vmul.f32 %v487, %v158
  %v511 = vmul.f32 %v487, %v162
  %515 = vrot.lane.b32.xlu0 %v509, 112
  %v516 = vpop.permute.xlu0 %515
  %517 = vrot.lane.b32.xlu0 %v510, 112
  %v518 = vpop.permute.xlu0 %517
  %519 = vrot.lane.b32.xlu0 %v511, 112
  %v520 = vpop.permute.xlu0 %519
  %v521 = vsel %vm453, %v516, %v518
  %v522 = vsel %vm453, %v518, %v520
  %v526 = vadd.f32 %v479, %v521
  %v527 = vadd.f32 %v480, %v522
  %v528 = vadd.f32 %v481, %v520
  %s529 = scalar_lea.vmem %s1, 112
  %v530 = vld [vmem:[%s529] sm:$0xff]
  %532 = vset.pattern.permute.xlu0 0
  %533 = vperm.xlu0 %532, %v530
  %v534 = vpop.permute.xlu0 %533
  %v536 = vmul.f32 %v534, %v185
  %v537 = vmul.f32 %v534, %v189
  %v538 = vmul.f32 %v534, %v193
  %542 = vrot.lane.b32.xlu0 %v536, 112
  %v543 = vpop.permute.xlu0 %542
  %544 = vrot.lane.b32.xlu0 %v537, 112
  %v545 = vpop.permute.xlu0 %544
  %546 = vrot.lane.b32.xlu0 %v538, 112
  %v547 = vpop.permute.xlu0 %546
  %v548 = vsel %vm453, %v543, %v545
  %v549 = vsel %vm453, %v545, %v547
  %v553 = vadd.f32 %v506, %v548
  %v554 = vadd.f32 %v507, %v549
  %v555 = vadd.f32 %v508, %v547
  %v556 = vmul.f32 %v534, %v209
  %v557 = vmul.f32 %v534, %v213
  %v558 = vmul.f32 %v534, %v217
  %562 = vrot.lane.b32.xlu0 %v556, 112
  %v563 = vpop.permute.xlu0 %562
  %564 = vrot.lane.b32.xlu0 %v557, 112
  %v565 = vpop.permute.xlu0 %564
  %566 = vrot.lane.b32.xlu0 %v558, 112
  %v567 = vpop.permute.xlu0 %566
  %v568 = vsel %vm453, %v563, %v565
  %v569 = vsel %vm453, %v565, %v567
  %v573 = vadd.f32 %v526, %v568
  %v574 = vadd.f32 %v527, %v569
  %v575 = vadd.f32 %v528, %v567
  %s576 = scalar_lea.vmem %s1, 120
  %v577 = vld [vmem:[%s576] sm:$0xff]
  %579 = vset.pattern.permute.xlu0 0
  %580 = vperm.xlu0 %579, %v577
  %v581 = vpop.permute.xlu0 %580
  %v583 = vmul.f32 %v581, %v240
  %v584 = vmul.f32 %v581, %v244
  %v585 = vmul.f32 %v581, %v248
  %589 = vrot.lane.b32.xlu0 %v583, 112
  %v590 = vpop.permute.xlu0 %589
  %591 = vrot.lane.b32.xlu0 %v584, 112
  %v592 = vpop.permute.xlu0 %591
  %593 = vrot.lane.b32.xlu0 %v585, 112
  %v594 = vpop.permute.xlu0 %593
  %v595 = vsel %vm453, %v590, %v592
  %v596 = vsel %vm453, %v592, %v594
  %v600 = vadd.f32 %v553, %v595
  %v601 = vadd.f32 %v554, %v596
  %v602 = vadd.f32 %v555, %v594
  %v603 = vmul.f32 %v581, %v264
  %v604 = vmul.f32 %v581, %v268
  %v605 = vmul.f32 %v581, %v272
  %609 = vrot.lane.b32.xlu0 %v603, 112
  %v610 = vpop.permute.xlu0 %609
  %611 = vrot.lane.b32.xlu0 %v604, 112
  %v612 = vpop.permute.xlu0 %611
  %613 = vrot.lane.b32.xlu0 %v605, 112
  %v614 = vpop.permute.xlu0 %613
  %v615 = vsel %vm453, %v610, %v612
  %v616 = vsel %vm453, %v612, %v614
  %v620 = vadd.f32 %v573, %v615
  %v621 = vadd.f32 %v574, %v616
  %v622 = vadd.f32 %v575, %v614
  %s623 = scalar_lea.vmem %s1, 128
  %v624 = vld [vmem:[%s623] sm:$0xff]
  %s625 = scalar_lea.vmem [#allocation2], 8
  %v626 = vld [vmem:[%s625] ss:$8 sm:$0x3]
  %628 = vset.pattern.permute.xlu0 0
  %629 = vperm.xlu0 %628, %v624
  %v630 = vpop.permute.xlu0 %629
  %v633 = vlaneseq
  %v634 = vshrl.u32 %v633, 7
  %v635 = vsub.s32 0, %v634
  %v636 = vrot.slane %v626, %v635
  %v637 = vlaneseq
  %v638 = vshrl.u32 %v637, 7
  %v639 = vsub.s32 1, %v638
  %v640 = vrot.slane %v626, %v639
  %v643 = vmul.f32 %v630, %v636
  %v644 = vmul.f32 %v630, %v640
  %647 = vrot.lane.b32.xlu0 %v643, 112
  %v648 = vpop.permute.xlu0 %647
  %649 = vrot.lane.b32.xlu0 %v644, 112
  %v650 = vpop.permute.xlu0 %649
  %v651 = vsel %vm453, %v648, %v650
  %v655 = vadd.f32 %v349, %v648
  %v656 = vadd.f32 %v350, %v651
  %v657 = vadd.f32 %v351, %v650
  %s658 = scalar_lea.vmem [#allocation2], 12
  %v659 = vld [vmem:[%s658] ss:$8 sm:$0x3]
  %v661 = vlaneseq
  %v662 = vshrl.u32 %v661, 7
  %v663 = vsub.s32 0, %v662
  %v664 = vrot.slane %v659, %v663
  %v665 = vlaneseq
  %v666 = vshrl.u32 %v665, 7
  %v667 = vsub.s32 1, %v666
  %v668 = vrot.slane %v659, %v667
  %v671 = vmul.f32 %v630, %v664
  %v672 = vmul.f32 %v630, %v668
  %675 = vrot.lane.b32.xlu0 %v671, 112
  %v676 = vpop.permute.xlu0 %675
  %677 = vrot.lane.b32.xlu0 %v672, 112
  %v678 = vpop.permute.xlu0 %677
  %v679 = vsel %vm453, %v676, %v678
  %v683 = vadd.f32 %v355, %v676
  %v684 = vadd.f32 %v356, %v679
  %v685 = vadd.f32 %v357, %v678
  %s686 = scalar_lea.vmem %s1, 136
  %v687 = vld [vmem:[%s686] sm:$0xff]
  %s688 = scalar_lea.vmem [#allocation2], 9
  %v689 = vld [vmem:[%s688] ss:$8 sm:$0x3]
  %691 = vset.pattern.permute.xlu0 0
  %692 = vperm.xlu0 %691, %v687
  %v693 = vpop.permute.xlu0 %692
  %v696 = vlaneseq
  %v697 = vshrl.u32 %v696, 7
  %v698 = vsub.s32 0, %v697
  %v699 = vrot.slane %v689, %v698
  %v700 = vlaneseq
  %v701 = vshrl.u32 %v700, 7
  %v702 = vsub.s32 1, %v701
  %v703 = vrot.slane %v689, %v702
  %v706 = vmul.f32 %v693, %v699
  %v707 = vmul.f32 %v693, %v703
  %710 = vrot.lane.b32.xlu0 %v706, 112
  %v711 = vpop.permute.xlu0 %710
  %712 = vrot.lane.b32.xlu0 %v707, 112
  %v713 = vpop.permute.xlu0 %712
  %v714 = vsel %vm453, %v711, %v713
  %v718 = vadd.f32 %v655, %v711
  %v719 = vadd.f32 %v656, %v714
  %v720 = vadd.f32 %v657, %v713
  %s721 = scalar_lea.vmem [#allocation2], 13
  %v722 = vld [vmem:[%s721] ss:$8 sm:$0x3]
  %v724 = vlaneseq
  %v725 = vshrl.u32 %v724, 7
  %v726 = vsub.s32 0, %v725
  %v727 = vrot.slane %v722, %v726
  %v728 = vlaneseq
  %v729 = vshrl.u32 %v728, 7
  %v730 = vsub.s32 1, %v729
  %v731 = vrot.slane %v722, %v730
  %v734 = vmul.f32 %v693, %v727
  %v735 = vmul.f32 %v693, %v731
  %738 = vrot.lane.b32.xlu0 %v734, 112
  %v739 = vpop.permute.xlu0 %738
  %740 = vrot.lane.b32.xlu0 %v735, 112
  %v741 = vpop.permute.xlu0 %740
  %v742 = vsel %vm453, %v739, %v741
  %v746 = vadd.f32 %v683, %v739
  %v747 = vadd.f32 %v684, %v742
  %v748 = vadd.f32 %v685, %v741
  %s749 = scalar_lea.vmem %s1, 144
  %v750 = vld [vmem:[%s749] sm:$0xff]
  %s751 = scalar_lea.vmem [#allocation2], 10
  %v752 = vld [vmem:[%s751] ss:$8 sm:$0x3]
  %754 = vset.pattern.permute.xlu0 0
  %755 = vperm.xlu0 %754, %v750
  %v756 = vpop.permute.xlu0 %755
  %v759 = vlaneseq
  %v760 = vshrl.u32 %v759, 7
  %v761 = vsub.s32 0, %v760
  %v762 = vrot.slane %v752, %v761
  %v763 = vlaneseq
  %v764 = vshrl.u32 %v763, 7
  %v765 = vsub.s32 1, %v764
  %v766 = vrot.slane %v752, %v765
  %v769 = vmul.f32 %v756, %v762
  %v770 = vmul.f32 %v756, %v766
  %773 = vrot.lane.b32.xlu0 %v769, 112
  %v774 = vpop.permute.xlu0 %773
  %775 = vrot.lane.b32.xlu0 %v770, 112
  %v776 = vpop.permute.xlu0 %775
  %v777 = vsel %vm453, %v774, %v776
  %v781 = vadd.f32 %v718, %v774
  %v782 = vadd.f32 %v719, %v777
  %v783 = vadd.f32 %v720, %v776
  %s784 = scalar_lea.vmem [#allocation2], 14
  %v785 = vld [vmem:[%s784] ss:$8 sm:$0x3]
  %v787 = vlaneseq
  %v788 = vshrl.u32 %v787, 7
  %v789 = vsub.s32 0, %v788
  %v790 = vrot.slane %v785, %v789
  %v791 = vlaneseq
  %v792 = vshrl.u32 %v791, 7
  %v793 = vsub.s32 1, %v792
  %v794 = vrot.slane %v785, %v793
  %v797 = vmul.f32 %v756, %v790
  %v798 = vmul.f32 %v756, %v794
  %801 = vrot.lane.b32.xlu0 %v797, 112
  %v802 = vpop.permute.xlu0 %801
  %803 = vrot.lane.b32.xlu0 %v798, 112
  %v804 = vpop.permute.xlu0 %803
  %v805 = vsel %vm453, %v802, %v804
  %v809 = vadd.f32 %v746, %v802
  %v810 = vadd.f32 %v747, %v805
  %v811 = vadd.f32 %v748, %v804
  %s812 = scalar_lea.vmem %s1, 152
  %v813 = vld [vmem:[%s812] sm:$0xff]
  %s814 = scalar_lea.vmem [#allocation2], 11
  %v815 = vld [vmem:[%s814] ss:$8 sm:$0x3]
  %817 = vset.pattern.permute.xlu0 0
  %818 = vperm.xlu0 %817, %v813
  %v819 = vpop.permute.xlu0 %818
  %v822 = vlaneseq
  %v823 = vshrl.u32 %v822, 7
  %v824 = vsub.s32 0, %v823
  %v825 = vrot.slane %v815, %v824
  %v826 = vlaneseq
  %v827 = vshrl.u32 %v826, 7
  %v828 = vsub.s32 1, %v827
  %v829 = vrot.slane %v815, %v828
  %v832 = vmul.f32 %v819, %v825
  %v833 = vmul.f32 %v819, %v829
  %836 = vrot.lane.b32.xlu0 %v832, 112
  %v837 = vpop.permute.xlu0 %836
  %838 = vrot.lane.b32.xlu0 %v833, 112
  %v839 = vpop.permute.xlu0 %838
  %v840 = vsel %vm453, %v837, %v839
  %v844 = vadd.f32 %v781, %v837
  %v845 = vadd.f32 %v782, %v840
  %v846 = vadd.f32 %v783, %v839
  %s847 = scalar_lea.vmem [#allocation2], 15
  %v848 = vld [vmem:[%s847] ss:$8 sm:$0x3]
  %v850 = vlaneseq
  %v851 = vshrl.u32 %v850, 7
  %v852 = vsub.s32 0, %v851
  %v853 = vrot.slane %v848, %v852
  %v854 = vlaneseq
  %v855 = vshrl.u32 %v854, 7
  %v856 = vsub.s32 1, %v855
  %v857 = vrot.slane %v848, %v856
  %v860 = vmul.f32 %v819, %v853
  %v861 = vmul.f32 %v819, %v857
  %864 = vrot.lane.b32.xlu0 %v860, 112
  %v865 = vpop.permute.xlu0 %864
  %866 = vrot.lane.b32.xlu0 %v861, 112
  %v867 = vpop.permute.xlu0 %866
  %v868 = vsel %vm453, %v865, %v867
  %v872 = vadd.f32 %v809, %v865
  %v873 = vadd.f32 %v810, %v868
  %v874 = vadd.f32 %v811, %v867
  %s875 = scalar_lea.vmem %s1, 160
  %v876 = vld [vmem:[%s875] sm:$0xff]
  %s877 = scalar_lea.vmem [#allocation2], 8
  %v878 = vld [vmem:[%s877] ss:$8 sm:$0x7]
  %880 = vset.pattern.permute.xlu0 0
  %881 = vperm.xlu0 %880, %v876
  %v882 = vpop.permute.xlu0 %881
  %v885 = vlaneseq
  %v886 = vshrl.u32 %v885, 7
  %v887 = vsub.s32 0, %v886
  %v888 = vrot.slane %v878, %v887
  %v889 = vlaneseq
  %v890 = vshrl.u32 %v889, 7
  %v891 = vsub.s32 1, %v890
  %v892 = vrot.slane %v878, %v891
  %v893 = vlaneseq
  %v894 = vshrl.u32 %v893, 7
  %v895 = vsub.s32 2, %v894
  %v896 = vrot.slane %v878, %v895
  %v900 = vmul.f32 %v882, %v888
  %v901 = vmul.f32 %v882, %v892
  %v902 = vmul.f32 %v882, %v896
  %906 = vrot.lane.b32.xlu0 %v900, 112
  %v907 = vpop.permute.xlu0 %906
  %908 = vrot.lane.b32.xlu0 %v901, 112
  %v909 = vpop.permute.xlu0 %908
  %910 = vrot.lane.b32.xlu0 %v902, 112
  %v911 = vpop.permute.xlu0 %910
  %v912 = vsel %vm453, %v907, %v909
  %v913 = vsel %vm453, %v909, %v911
  %v917 = vadd.f32 %v425, %v907
  %v918 = vadd.f32 %v426, %v912
  %v919 = vadd.f32 %v427, %v913
  %s920 = scalar_lea.vmem [#allocation2], 12
  %v921 = vld [vmem:[%s920] ss:$8 sm:$0x7]
  %v923 = vlaneseq
  %v924 = vshrl.u32 %v923, 7
  %v925 = vsub.s32 0, %v924
  %v926 = vrot.slane %v921, %v925
  %v927 = vlaneseq
  %v928 = vshrl.u32 %v927, 7
  %v929 = vsub.s32 1, %v928
  %v930 = vrot.slane %v921, %v929
  %v931 = vlaneseq
  %v932 = vshrl.u32 %v931, 7
  %v933 = vsub.s32 2, %v932
  %v934 = vrot.slane %v921, %v933
  %v938 = vmul.f32 %v882, %v926
  %v939 = vmul.f32 %v882, %v930
  %v940 = vmul.f32 %v882, %v934
  %944 = vrot.lane.b32.xlu0 %v938, 112
  %v945 = vpop.permute.xlu0 %944
  %946 = vrot.lane.b32.xlu0 %v939, 112
  %v947 = vpop.permute.xlu0 %946
  %948 = vrot.lane.b32.xlu0 %v940, 112
  %v949 = vpop.permute.xlu0 %948
  %v950 = vsel %vm453, %v945, %v947
  %v951 = vsel %vm453, %v947, %v949
  %v955 = vadd.f32 %v431, %v945
  %v956 = vadd.f32 %v432, %v950
  %v957 = vadd.f32 %v433, %v951
  %s958 = scalar_lea.vmem %s1, 168
  %v959 = vld [vmem:[%s958] sm:$0xff]
  %s960 = scalar_lea.vmem [#allocation2], 9
  %v961 = vld [vmem:[%s960] ss:$8 sm:$0x7]
  %963 = vset.pattern.permute.xlu0 0
  %964 = vperm.xlu0 %963, %v959
  %v965 = vpop.permute.xlu0 %964
  %v968 = vlaneseq
  %v969 = vshrl.u32 %v968, 7
  %v970 = vsub.s32 0, %v969
  %v971 = vrot.slane %v961, %v970
  %v972 = vlaneseq
  %v973 = vshrl.u32 %v972, 7
  %v974 = vsub.s32 1, %v973
  %v975 = vrot.slane %v961, %v974
  %v976 = vlaneseq
  %v977 = vshrl.u32 %v976, 7
  %v978 = vsub.s32 2, %v977
  %v979 = vrot.slane %v961, %v978
  %v983 = vmul.f32 %v965, %v971
  %v984 = vmul.f32 %v965, %v975
  %v985 = vmul.f32 %v965, %v979
  %989 = vrot.lane.b32.xlu0 %v983, 112
  %v990 = vpop.permute.xlu0 %989
  %991 = vrot.lane.b32.xlu0 %v984, 112
  %v992 = vpop.permute.xlu0 %991
  %993 = vrot.lane.b32.xlu0 %v985, 112
  %v994 = vpop.permute.xlu0 %993
  %v995 = vsel %vm453, %v990, %v992
  %v996 = vsel %vm453, %v992, %v994
  %v1000 = vadd.f32 %v917, %v990
  %v1001 = vadd.f32 %v918, %v995
  %v1002 = vadd.f32 %v919, %v996
  %s1003 = scalar_lea.vmem [#allocation2], 13
  %v1004 = vld [vmem:[%s1003] ss:$8 sm:$0x7]
  %v1006 = vlaneseq
  %v1007 = vshrl.u32 %v1006, 7
  %v1008 = vsub.s32 0, %v1007
  %v1009 = vrot.slane %v1004, %v1008
  %v1010 = vlaneseq
  %v1011 = vshrl.u32 %v1010, 7
  %v1012 = vsub.s32 1, %v1011
  %v1013 = vrot.slane %v1004, %v1012
  %v1014 = vlaneseq
  %v1015 = vshrl.u32 %v1014, 7
  %v1016 = vsub.s32 2, %v1015
  %v1017 = vrot.slane %v1004, %v1016
  %v1021 = vmul.f32 %v965, %v1009
  %v1022 = vmul.f32 %v965, %v1013
  %v1023 = vmul.f32 %v965, %v1017
  %1027 = vrot.lane.b32.xlu0 %v1021, 112
  %v1028 = vpop.permute.xlu0 %1027
  %1029 = vrot.lane.b32.xlu0 %v1022, 112
  %v1030 = vpop.permute.xlu0 %1029
  %1031 = vrot.lane.b32.xlu0 %v1023, 112
  %v1032 = vpop.permute.xlu0 %1031
  %v1033 = vsel %vm453, %v1028, %v1030
  %v1034 = vsel %vm453, %v1030, %v1032
  %v1038 = vadd.f32 %v955, %v1028
  %v1039 = vadd.f32 %v956, %v1033
  %v1040 = vadd.f32 %v957, %v1034
  %s1041 = scalar_lea.vmem %s1, 176
  %v1042 = vld [vmem:[%s1041] sm:$0xff]
  %s1043 = scalar_lea.vmem [#allocation2], 10
  %v1044 = vld [vmem:[%s1043] ss:$8 sm:$0x7]
  %1046 = vset.pattern.permute.xlu0 0
  %1047 = vperm.xlu0 %1046, %v1042
  %v1048 = vpop.permute.xlu0 %1047
  %v1051 = vlaneseq
  %v1052 = vshrl.u32 %v1051, 7
  %v1053 = vsub.s32 0, %v1052
  %v1054 = vrot.slane %v1044, %v1053
  %v1055 = vlaneseq
  %v1056 = vshrl.u32 %v1055, 7
  %v1057 = vsub.s32 1, %v1056
  %v1058 = vrot.slane %v1044, %v1057
  %v1059 = vlaneseq
  %v1060 = vshrl.u32 %v1059, 7
  %v1061 = vsub.s32 2, %v1060
  %v1062 = vrot.slane %v1044, %v1061
  %v1066 = vmul.f32 %v1048, %v1054
  %v1067 = vmul.f32 %v1048, %v1058
  %v1068 = vmul.f32 %v1048, %v1062
  %1072 = vrot.lane.b32.xlu0 %v1066, 112
  %v1073 = vpop.permute.xlu0 %1072
  %1074 = vrot.lane.b32.xlu0 %v1067, 112
  %v1075 = vpop.permute.xlu0 %1074
  %1076 = vrot.lane.b32.xlu0 %v1068, 112
  %v1077 = vpop.permute.xlu0 %1076
  %v1078 = vsel %vm453, %v1073, %v1075
  %v1079 = vsel %vm453, %v1075, %v1077
  %v1083 = vadd.f32 %v1000, %v1073
  %v1084 = vadd.f32 %v1001, %v1078
  %v1085 = vadd.f32 %v1002, %v1079
  %s1086 = scalar_lea.vmem [#allocation2], 14
  %v1087 = vld [vmem:[%s1086] ss:$8 sm:$0x7]
  %v1089 = vlaneseq
  %v1090 = vshrl.u32 %v1089, 7
  %v1091 = vsub.s32 0, %v1090
  %v1092 = vrot.slane %v1087, %v1091
  %v1093 = vlaneseq
  %v1094 = vshrl.u32 %v1093, 7
  %v1095 = vsub.s32 1, %v1094
  %v1096 = vrot.slane %v1087, %v1095
  %v1097 = vlaneseq
  %v1098 = vshrl.u32 %v1097, 7
  %v1099 = vsub.s32 2, %v1098
  %v1100 = vrot.slane %v1087, %v1099
  %v1104 = vmul.f32 %v1048, %v1092
  %v1105 = vmul.f32 %v1048, %v1096
  %v1106 = vmul.f32 %v1048, %v1100
  %1110 = vrot.lane.b32.xlu0 %v1104, 112
  %v1111 = vpop.permute.xlu0 %1110
  %1112 = vrot.lane.b32.xlu0 %v1105, 112
  %v1113 = vpop.permute.xlu0 %1112
  %1114 = vrot.lane.b32.xlu0 %v1106, 112
  %v1115 = vpop.permute.xlu0 %1114
  %v1116 = vsel %vm453, %v1111, %v1113
  %v1117 = vsel %vm453, %v1113, %v1115
  %v1121 = vadd.f32 %v1038, %v1111
  %v1122 = vadd.f32 %v1039, %v1116
  %v1123 = vadd.f32 %v1040, %v1117
  %s1124 = scalar_lea.vmem %s1, 184
  %v1125 = vld [vmem:[%s1124] sm:$0xff]
  %s1126 = scalar_lea.vmem [#allocation2], 11
  %v1127 = vld [vmem:[%s1126] ss:$8 sm:$0x7]
  %1129 = vset.pattern.permute.xlu0 0
  %1130 = vperm.xlu0 %1129, %v1125
  %v1131 = vpop.permute.xlu0 %1130
  %v1134 = vlaneseq
  %v1135 = vshrl.u32 %v1134, 7
  %v1136 = vsub.s32 0, %v1135
  %v1137 = vrot.slane %v1127, %v1136
  %v1138 = vlaneseq
  %v1139 = vshrl.u32 %v1138, 7
  %v1140 = vsub.s32 1, %v1139
  %v1141 = vrot.slane %v1127, %v1140
  %v1142 = vlaneseq
  %v1143 = vshrl.u32 %v1142, 7
  %v1144 = vsub.s32 2, %v1143
  %v1145 = vrot.slane %v1127, %v1144
  %v1149 = vmul.f32 %v1131, %v1137
  %v1150 = vmul.f32 %v1131, %v1141
  %v1151 = vmul.f32 %v1131, %v1145
  %1155 = vrot.lane.b32.xlu0 %v1149, 112
  %v1156 = vpop.permute.xlu0 %1155
  %1157 = vrot.lane.b32.xlu0 %v1150, 112
  %v1158 = vpop.permute.xlu0 %1157
  %1159 = vrot.lane.b32.xlu0 %v1151, 112
  %v1160 = vpop.permute.xlu0 %1159
  %v1161 = vsel %vm453, %v1156, %v1158
  %v1162 = vsel %vm453, %v1158, %v1160
  %v1166 = vadd.f32 %v1083, %v1156
  %v1167 = vadd.f32 %v1084, %v1161
  %v1168 = vadd.f32 %v1085, %v1162
  %s1169 = scalar_lea.vmem [#allocation2], 15
  %v1170 = vld [vmem:[%s1169] ss:$8 sm:$0x7]
  %v1172 = vlaneseq
  %v1173 = vshrl.u32 %v1172, 7
  %v1174 = vsub.s32 0, %v1173
  %v1175 = vrot.slane %v1170, %v1174
  %v1176 = vlaneseq
  %v1177 = vshrl.u32 %v1176, 7
  %v1178 = vsub.s32 1, %v1177
  %v1179 = vrot.slane %v1170, %v1178
  %v1180 = vlaneseq
  %v1181 = vshrl.u32 %v1180, 7
  %v1182 = vsub.s32 2, %v1181
  %v1183 = vrot.slane %v1170, %v1182
  %v1187 = vmul.f32 %v1131, %v1175
  %v1188 = vmul.f32 %v1131, %v1179
  %v1189 = vmul.f32 %v1131, %v1183
  %1193 = vrot.lane.b32.xlu0 %v1187, 112
  %v1194 = vpop.permute.xlu0 %1193
  %1195 = vrot.lane.b32.xlu0 %v1188, 112
  %v1196 = vpop.permute.xlu0 %1195
  %1197 = vrot.lane.b32.xlu0 %v1189, 112
  %v1198 = vpop.permute.xlu0 %1197
  %v1199 = vsel %vm453, %v1194, %v1196
  %v1200 = vsel %vm453, %v1196, %v1198
  %v1204 = vadd.f32 %v1121, %v1194
  %v1205 = vadd.f32 %v1122, %v1199
  %v1206 = vadd.f32 %v1123, %v1200
  %s1207 = scalar_lea.vmem %s1, 192
  %v1208 = vld [vmem:[%s1207] sm:$0xff]
  %1210 = vset.pattern.permute.xlu0 0
  %1211 = vperm.xlu0 %1210, %v1208
  %v1212 = vpop.permute.xlu0 %1211
  %v1214 = vmul.f32 %v1212, %v888
  %v1215 = vmul.f32 %v1212, %v892
  %v1216 = vmul.f32 %v1212, %v896
  %1220 = vrot.lane.b32.xlu0 %v1214, 96
  %v1221 = vpop.permute.xlu0 %1220
  %1222 = vrot.lane.b32.xlu0 %v1215, 96
  %v1223 = vpop.permute.xlu0 %1222
  %1224 = vrot.lane.b32.xlu0 %v1216, 96
  %v1225 = vpop.permute.xlu0 %1224
  %vm1226 = vcmask 785408
  %v1227 = vsel %vm1226, %v1221, %v1223
  %v1228 = vsel %vm1226, %v1223, %v1225
  %v1232 = vadd.f32 %v600, %v1221
  %v1233 = vadd.f32 %v601, %v1227
  %v1234 = vadd.f32 %v602, %v1228
  %v1235 = vmul.f32 %v1212, %v926
  %v1236 = vmul.f32 %v1212, %v930
  %v1237 = vmul.f32 %v1212, %v934
  %1241 = vrot.lane.b32.xlu0 %v1235, 96
  %v1242 = vpop.permute.xlu0 %1241
  %1243 = vrot.lane.b32.xlu0 %v1236, 96
  %v1244 = vpop.permute.xlu0 %1243
  %1245 = vrot.lane.b32.xlu0 %v1237, 96
  %v1246 = vpop.permute.xlu0 %1245
  %v1247 = vsel %vm1226, %v1242, %v1244
  %v1248 = vsel %vm1226, %v1244, %v1246
  %v1252 = vadd.f32 %v620, %v1242
  %v1253 = vadd.f32 %v621, %v1247
  %v1254 = vadd.f32 %v622, %v1248
  %s1255 = scalar_lea.vmem %s1, 200
  %v1256 = vld [vmem:[%s1255] sm:$0xff]
  %1258 = vset.pattern.permute.xlu0 0
  %1259 = vperm.xlu0 %1258, %v1256
  %v1260 = vpop.permute.xlu0 %1259
  %v1262 = vmul.f32 %v1260, %v971
  %v1263 = vmul.f32 %v1260, %v975
  %v1264 = vmul.f32 %v1260, %v979
  %1268 = vrot.lane.b32.xlu0 %v1262, 96
  %v1269 = vpop.permute.xlu0 %1268
  %1270 = vrot.lane.b32.xlu0 %v1263, 96
  %v1271 = vpop.permute.xlu0 %1270
  %1272 = vrot.lane.b32.xlu0 %v1264, 96
  %v1273 = vpop.permute.xlu0 %1272
  %v1274 = vsel %vm1226, %v1269, %v1271
  %v1275 = vsel %vm1226, %v1271, %v1273
  %v1279 = vadd.f32 %v1232, %v1269
  %v1280 = vadd.f32 %v1233, %v1274
  %v1281 = vadd.f32 %v1234, %v1275
  %v1282 = vmul.f32 %v1260, %v1009
  %v1283 = vmul.f32 %v1260, %v1013
  %v1284 = vmul.f32 %v1260, %v1017
  %1288 = vrot.lane.b32.xlu0 %v1282, 96
  %v1289 = vpop.permute.xlu0 %1288
  %1290 = vrot.lane.b32.xlu0 %v1283, 96
  %v1291 = vpop.permute.xlu0 %1290
  %1292 = vrot.lane.b32.xlu0 %v1284, 96
  %v1293 = vpop.permute.xlu0 %1292
  %v1294 = vsel %vm1226, %v1289, %v1291
  %v1295 = vsel %vm1226, %v1291, %v1293
  %v1299 = vadd.f32 %v1252, %v1289
  %v1300 = vadd.f32 %v1253, %v1294
  %v1301 = vadd.f32 %v1254, %v1295
  %s1302 = scalar_lea.vmem %s1, 208
  %v1303 = vld [vmem:[%s1302] sm:$0xff]
  %1305 = vset.pattern.permute.xlu0 0
  %1306 = vperm.xlu0 %1305, %v1303
  %v1307 = vpop.permute.xlu0 %1306
  %v1309 = vmul.f32 %v1307, %v1054
  %v1310 = vmul.f32 %v1307, %v1058
  %v1311 = vmul.f32 %v1307, %v1062
  %1315 = vrot.lane.b32.xlu0 %v1309, 96
  %v1316 = vpop.permute.xlu0 %1315
  %1317 = vrot.lane.b32.xlu0 %v1310, 96
  %v1318 = vpop.permute.xlu0 %1317
  %1319 = vrot.lane.b32.xlu0 %v1311, 96
  %v1320 = vpop.permute.xlu0 %1319
  %v1321 = vsel %vm1226, %v1316, %v1318
  %v1322 = vsel %vm1226, %v1318, %v1320
  %v1326 = vadd.f32 %v1279, %v1316
  %v1327 = vadd.f32 %v1280, %v1321
  %v1328 = vadd.f32 %v1281, %v1322
  %v1329 = vmul.f32 %v1307, %v1092
  %v1330 = vmul.f32 %v1307, %v1096
  %v1331 = vmul.f32 %v1307, %v1100
  %1335 = vrot.lane.b32.xlu0 %v1329, 96
  %v1336 = vpop.permute.xlu0 %1335
  %1337 = vrot.lane.b32.xlu0 %v1330, 96
  %v1338 = vpop.permute.xlu0 %1337
  %1339 = vrot.lane.b32.xlu0 %v1331, 96
  %v1340 = vpop.permute.xlu0 %1339
  %v1341 = vsel %vm1226, %v1336, %v1338
  %v1342 = vsel %vm1226, %v1338, %v1340
  %v1346 = vadd.f32 %v1299, %v1336
  %v1347 = vadd.f32 %v1300, %v1341
  %v1348 = vadd.f32 %v1301, %v1342
  %s1349 = scalar_lea.vmem %s1, 216
  %v1350 = vld [vmem:[%s1349] sm:$0xff]
  %1352 = vset.pattern.permute.xlu0 0
  %1353 = vperm.xlu0 %1352, %v1350
  %v1354 = vpop.permute.xlu0 %1353
  %v1356 = vmul.f32 %v1354, %v1137
  %v1357 = vmul.f32 %v1354, %v1141
  %v1358 = vmul.f32 %v1354, %v1145
  %1362 = vrot.lane.b32.xlu0 %v1356, 96
  %v1363 = vpop.permute.xlu0 %1362
  %1364 = vrot.lane.b32.xlu0 %v1357, 96
  %v1365 = vpop.permute.xlu0 %1364
  %1366 = vrot.lane.b32.xlu0 %v1358, 96
  %v1367 = vpop.permute.xlu0 %1366
  %v1368 = vsel %vm1226, %v1363, %v1365
  %v1369 = vsel %vm1226, %v1365, %v1367
  %v1373 = vadd.f32 %v1326, %v1363
  %v1374 = vadd.f32 %v1327, %v1368
  %v1375 = vadd.f32 %v1328, %v1369
  %v1376 = vmul.f32 %v1354, %v1175
  %v1377 = vmul.f32 %v1354, %v1179
  %v1378 = vmul.f32 %v1354, %v1183
  %1382 = vrot.lane.b32.xlu0 %v1376, 96
  %v1383 = vpop.permute.xlu0 %1382
  %1384 = vrot.lane.b32.xlu0 %v1377, 96
  %v1385 = vpop.permute.xlu0 %1384
  %1386 = vrot.lane.b32.xlu0 %v1378, 96
  %v1387 = vpop.permute.xlu0 %1386
  %v1388 = vsel %vm1226, %v1383, %v1385
  %v1389 = vsel %vm1226, %v1385, %v1387
  %v1393 = vadd.f32 %v1346, %v1383
  %v1394 = vadd.f32 %v1347, %v1388
  %v1395 = vadd.f32 %v1348, %v1389
  %s1396 = scalar_lea.vmem %s1, 224
  %v1397 = vld [vmem:[%s1396] sm:$0xff]
  %1399 = vset.pattern.permute.xlu0 0
  %1400 = vperm.xlu0 %1399, %v1397
  %v1401 = vpop.permute.xlu0 %1400
  %v1403 = vmul.f32 %v1401, %v888
  %v1404 = vmul.f32 %v1401, %v892
  %v1405 = vmul.f32 %v1401, %v896
  %1409 = vrot.lane.b32.xlu0 %v1403, 96
  %v1410 = vpop.permute.xlu0 %1409
  %1411 = vrot.lane.b32.xlu0 %v1404, 96
  %v1412 = vpop.permute.xlu0 %1411
  %1413 = vrot.lane.b32.xlu0 %v1405, 96
  %v1414 = vpop.permute.xlu0 %1413
  %v1415 = vsel %vm1226, %v1410, %v1412
  %v1416 = vsel %vm1226, %v1412, %v1414
  %v1420 = vadd.f32 %v844, %v1410
  %v1421 = vadd.f32 %v845, %v1415
  %v1422 = vadd.f32 %v846, %v1416
  %v1423 = vmul.f32 %v1401, %v926
  %v1424 = vmul.f32 %v1401, %v930
  %v1425 = vmul.f32 %v1401, %v934
  %1429 = vrot.lane.b32.xlu0 %v1423, 96
  %v1430 = vpop.permute.xlu0 %1429
  %1431 = vrot.lane.b32.xlu0 %v1424, 96
  %v1432 = vpop.permute.xlu0 %1431
  %1433 = vrot.lane.b32.xlu0 %v1425, 96
  %v1434 = vpop.permute.xlu0 %1433
  %v1435 = vsel %vm1226, %v1430, %v1432
  %v1436 = vsel %vm1226, %v1432, %v1434
  %v1440 = vadd.f32 %v872, %v1430
  %v1441 = vadd.f32 %v873, %v1435
  %v1442 = vadd.f32 %v874, %v1436
  %s1443 = scalar_lea.vmem %s1, 232
  %v1444 = vld [vmem:[%s1443] sm:$0xff]
  %1446 = vset.pattern.permute.xlu0 0
  %1447 = vperm.xlu0 %1446, %v1444
  %v1448 = vpop.permute.xlu0 %1447
  %v1450 = vmul.f32 %v1448, %v971
  %v1451 = vmul.f32 %v1448, %v975
  %v1452 = vmul.f32 %v1448, %v979
  %1456 = vrot.lane.b32.xlu0 %v1450, 96
  %v1457 = vpop.permute.xlu0 %1456
  %1458 = vrot.lane.b32.xlu0 %v1451, 96
  %v1459 = vpop.permute.xlu0 %1458
  %1460 = vrot.lane.b32.xlu0 %v1452, 96
  %v1461 = vpop.permute.xlu0 %1460
  %v1462 = vsel %vm1226, %v1457, %v1459
  %v1463 = vsel %vm1226, %v1459, %v1461
  %v1467 = vadd.f32 %v1420, %v1457
  %v1468 = vadd.f32 %v1421, %v1462
  %v1469 = vadd.f32 %v1422, %v1463
  %v1470 = vmul.f32 %v1448, %v1009
  %v1471 = vmul.f32 %v1448, %v1013
  %v1472 = vmul.f32 %v1448, %v1017
  %1476 = vrot.lane.b32.xlu0 %v1470, 96
  %v1477 = vpop.permute.xlu0 %1476
  %1478 = vrot.lane.b32.xlu0 %v1471, 96
  %v1479 = vpop.permute.xlu0 %1478
  %1480 = vrot.lane.b32.xlu0 %v1472, 96
  %v1481 = vpop.permute.xlu0 %1480
  %v1482 = vsel %vm1226, %v1477, %v1479
  %v1483 = vsel %vm1226, %v1479, %v1481
  %v1487 = vadd.f32 %v1440, %v1477
  %v1488 = vadd.f32 %v1441, %v1482
  %v1489 = vadd.f32 %v1442, %v1483
  %s1490 = scalar_lea.vmem %s1, 240
  %v1491 = vld [vmem:[%s1490] sm:$0xff]
  %1493 = vset.pattern.permute.xlu0 0
  %1494 = vperm.xlu0 %1493, %v1491
  %v1495 = vpop.permute.xlu0 %1494
  %v1497 = vmul.f32 %v1495, %v1054
  %v1498 = vmul.f32 %v1495, %v1058
  %v1499 = vmul.f32 %v1495, %v1062
  %1503 = vrot.lane.b32.xlu0 %v1497, 96
  %v1504 = vpop.permute.xlu0 %1503
  %1505 = vrot.lane.b32.xlu0 %v1498, 96
  %v1506 = vpop.permute.xlu0 %1505
  %1507 = vrot.lane.b32.xlu0 %v1499, 96
  %v1508 = vpop.permute.xlu0 %1507
  %v1509 = vsel %vm1226, %v1504, %v1506
  %v1510 = vsel %vm1226, %v1506, %v1508
  %v1514 = vadd.f32 %v1467, %v1504
  %v1515 = vadd.f32 %v1468, %v1509
  %v1516 = vadd.f32 %v1469, %v1510
  %v1517 = vmul.f32 %v1495, %v1092
  %v1518 = vmul.f32 %v1495, %v1096
  %v1519 = vmul.f32 %v1495, %v1100
  %1523 = vrot.lane.b32.xlu0 %v1517, 96
  %v1524 = vpop.permute.xlu0 %1523
  %1525 = vrot.lane.b32.xlu0 %v1518, 96
  %v1526 = vpop.permute.xlu0 %1525
  %1527 = vrot.lane.b32.xlu0 %v1519, 96
  %v1528 = vpop.permute.xlu0 %1527
  %v1529 = vsel %vm1226, %v1524, %v1526
  %v1530 = vsel %vm1226, %v1526, %v1528
  %v1534 = vadd.f32 %v1487, %v1524
  %v1535 = vadd.f32 %v1488, %v1529
  %v1536 = vadd.f32 %v1489, %v1530
  %s1537 = scalar_lea.vmem %s1, 248
  %v1538 = vld [vmem:[%s1537] sm:$0xff]
  %1540 = vset.pattern.permute.xlu0 0
  %1541 = vperm.xlu0 %1540, %v1538
  %v1542 = vpop.permute.xlu0 %1541
  %v1544 = vmul.f32 %v1542, %v1137
  %v1545 = vmul.f32 %v1542, %v1141
  %v1546 = vmul.f32 %v1542, %v1145
  %1550 = vrot.lane.b32.xlu0 %v1544, 96
  %v1551 = vpop.permute.xlu0 %1550
  %1552 = vrot.lane.b32.xlu0 %v1545, 96
  %v1553 = vpop.permute.xlu0 %1552
  %1554 = vrot.lane.b32.xlu0 %v1546, 96
  %v1555 = vpop.permute.xlu0 %1554
  %v1556 = vsel %vm1226, %v1551, %v1553
  %v1557 = vsel %vm1226, %v1553, %v1555
  %v1561 = vadd.f32 %v1514, %v1551
  %v1562 = vadd.f32 %v1515, %v1556
  %v1563 = vadd.f32 %v1516, %v1557
  %v1564 = vmul.f32 %v1542, %v1175
  %v1565 = vmul.f32 %v1542, %v1179
  %v1566 = vmul.f32 %v1542, %v1183
  %1570 = vrot.lane.b32.xlu0 %v1564, 96
  %v1571 = vpop.permute.xlu0 %1570
  %1572 = vrot.lane.b32.xlu0 %v1565, 96
  %v1573 = vpop.permute.xlu0 %1572
  %1574 = vrot.lane.b32.xlu0 %v1566, 96
  %v1575 = vpop.permute.xlu0 %1574
  %v1576 = vsel %vm1226, %v1571, %v1573
  %v1577 = vsel %vm1226, %v1573, %v1575
  %v1581 = vadd.f32 %v1534, %v1571
  %v1582 = vadd.f32 %v1535, %v1576
  %v1583 = vadd.f32 %v1536, %v1577
  %s1584 = scalar_lea.vmem %s1, 256
  %v1585 = vld [vmem:[%s1584] sm:$0xff]
  %1587 = vset.pattern.permute.xlu0 0
  %1588 = vperm.xlu0 %1587, %v1585
  %v1589 = vpop.permute.xlu0 %1588
  %v1591 = vmul.f32 %v1589, %v888
  %v1592 = vmul.f32 %v1589, %v892
  %v1593 = vmul.f32 %v1589, %v896
  %1597 = vrot.lane.b32.xlu0 %v1591, 96
  %v1598 = vpop.permute.xlu0 %1597
  %1599 = vrot.lane.b32.xlu0 %v1592, 96
  %v1600 = vpop.permute.xlu0 %1599
  %1601 = vrot.lane.b32.xlu0 %v1593, 96
  %v1602 = vpop.permute.xlu0 %1601
  %v1603 = vsel %vm1226, %v1598, %v1600
  %v1604 = vsel %vm1226, %v1600, %v1602
  %v1608 = vadd.f32 %v1166, %v1598
  %v1609 = vadd.f32 %v1167, %v1603
  %v1610 = vadd.f32 %v1168, %v1604
  %v1611 = vmul.f32 %v1589, %v926
  %v1612 = vmul.f32 %v1589, %v930
  %v1613 = vmul.f32 %v1589, %v934
  %1617 = vrot.lane.b32.xlu0 %v1611, 96
  %v1618 = vpop.permute.xlu0 %1617
  %1619 = vrot.lane.b32.xlu0 %v1612, 96
  %v1620 = vpop.permute.xlu0 %1619
  %1621 = vrot.lane.b32.xlu0 %v1613, 96
  %v1622 = vpop.permute.xlu0 %1621
  %v1623 = vsel %vm1226, %v1618, %v1620
  %v1624 = vsel %vm1226, %v1620, %v1622
  %v1628 = vadd.f32 %v1204, %v1618
  %v1629 = vadd.f32 %v1205, %v1623
  %v1630 = vadd.f32 %v1206, %v1624
  %s1631 = scalar_lea.vmem %s1, 264
  %v1632 = vld [vmem:[%s1631] sm:$0xff]
  %1634 = vset.pattern.permute.xlu0 0
  %1635 = vperm.xlu0 %1634, %v1632
  %v1636 = vpop.permute.xlu0 %1635
  %v1638 = vmul.f32 %v1636, %v971
  %v1639 = vmul.f32 %v1636, %v975
  %v1640 = vmul.f32 %v1636, %v979
  %1644 = vrot.lane.b32.xlu0 %v1638, 96
  %v1645 = vpop.permute.xlu0 %1644
  %1646 = vrot.lane.b32.xlu0 %v1639, 96
  %v1647 = vpop.permute.xlu0 %1646
  %1648 = vrot.lane.b32.xlu0 %v1640, 96
  %v1649 = vpop.permute.xlu0 %1648
  %v1650 = vsel %vm1226, %v1645, %v1647
  %v1651 = vsel %vm1226, %v1647, %v1649
  %v1655 = vadd.f32 %v1608, %v1645
  %v1656 = vadd.f32 %v1609, %v1650
  %v1657 = vadd.f32 %v1610, %v1651
  %v1658 = vmul.f32 %v1636, %v1009
  %v1659 = vmul.f32 %v1636, %v1013
  %v1660 = vmul.f32 %v1636, %v1017
  %1664 = vrot.lane.b32.xlu0 %v1658, 96
  %v1665 = vpop.permute.xlu0 %1664
  %1666 = vrot.lane.b32.xlu0 %v1659, 96
  %v1667 = vpop.permute.xlu0 %1666
  %1668 = vrot.lane.b32.xlu0 %v1660, 96
  %v1669 = vpop.permute.xlu0 %1668
  %v1670 = vsel %vm1226, %v1665, %v1667
  %v1671 = vsel %vm1226, %v1667, %v1669
  %v1675 = vadd.f32 %v1628, %v1665
  %v1676 = vadd.f32 %v1629, %v1670
  %v1677 = vadd.f32 %v1630, %v1671
  %s1678 = scalar_lea.vmem %s1, 272
  %v1679 = vld [vmem:[%s1678] sm:$0xff]
  %1681 = vset.pattern.permute.xlu0 0
  %1682 = vperm.xlu0 %1681, %v1679
  %v1683 = vpop.permute.xlu0 %1682
  %v1685 = vmul.f32 %v1683, %v1054
  %v1686 = vmul.f32 %v1683, %v1058
  %v1687 = vmul.f32 %v1683, %v1062
  %1691 = vrot.lane.b32.xlu0 %v1685, 96
  %v1692 = vpop.permute.xlu0 %1691
  %1693 = vrot.lane.b32.xlu0 %v1686, 96
  %v1694 = vpop.permute.xlu0 %1693
  %1695 = vrot.lane.b32.xlu0 %v1687, 96
  %v1696 = vpop.permute.xlu0 %1695
  %v1697 = vsel %vm1226, %v1692, %v1694
  %v1698 = vsel %vm1226, %v1694, %v1696
  %v1702 = vadd.f32 %v1655, %v1692
  %v1703 = vadd.f32 %v1656, %v1697
  %v1704 = vadd.f32 %v1657, %v1698
  %v1705 = vmul.f32 %v1683, %v1092
  %v1706 = vmul.f32 %v1683, %v1096
  %v1707 = vmul.f32 %v1683, %v1100
  %1711 = vrot.lane.b32.xlu0 %v1705, 96
  %v1712 = vpop.permute.xlu0 %1711
  %1713 = vrot.lane.b32.xlu0 %v1706, 96
  %v1714 = vpop.permute.xlu0 %1713
  %1715 = vrot.lane.b32.xlu0 %v1707, 96
  %v1716 = vpop.permute.xlu0 %1715
  %v1717 = vsel %vm1226, %v1712, %v1714
  %v1718 = vsel %vm1226, %v1714, %v1716
  %v1722 = vadd.f32 %v1675, %v1712
  %v1723 = vadd.f32 %v1676, %v1717
  %v1724 = vadd.f32 %v1677, %v1718
  %s1725 = scalar_lea.vmem %s1, 280
  %v1726 = vld [vmem:[%s1725] sm:$0xff]
  %1728 = vset.pattern.permute.xlu0 0
  %1729 = vperm.xlu0 %1728, %v1726
  %v1730 = vpop.permute.xlu0 %1729
  %v1732 = vmul.f32 %v1730, %v1137
  %v1733 = vmul.f32 %v1730, %v1141
  %v1734 = vmul.f32 %v1730, %v1145
  %1738 = vrot.lane.b32.xlu0 %v1732, 96
  %v1739 = vpop.permute.xlu0 %1738
  %1740 = vrot.lane.b32.xlu0 %v1733, 96
  %v1741 = vpop.permute.xlu0 %1740
  %1742 = vrot.lane.b32.xlu0 %v1734, 96
  %v1743 = vpop.permute.xlu0 %1742
  %v1744 = vsel %vm1226, %v1739, %v1741
  %v1745 = vsel %vm1226, %v1741, %v1743
  %v1749 = vadd.f32 %v1702, %v1739
  %v1750 = vadd.f32 %v1703, %v1744
  %v1751 = vadd.f32 %v1704, %v1745
  %v1752 = vmul.f32 %v1730, %v1175
  %v1753 = vmul.f32 %v1730, %v1179
  %v1754 = vmul.f32 %v1730, %v1183
  %1758 = vrot.lane.b32.xlu0 %v1752, 96
  %v1759 = vpop.permute.xlu0 %1758
  %1760 = vrot.lane.b32.xlu0 %v1753, 96
  %v1761 = vpop.permute.xlu0 %1760
  %1762 = vrot.lane.b32.xlu0 %v1754, 96
  %v1763 = vpop.permute.xlu0 %1762
  %v1764 = vsel %vm1226, %v1759, %v1761
  %v1765 = vsel %vm1226, %v1761, %v1763
  %v1769 = vadd.f32 %v1722, %v1759
  %v1770 = vadd.f32 %v1723, %v1764
  %v1771 = vadd.f32 %v1724, %v1765
  %v1772 = vsel %vm54, 1, 0
  %v1773 = vsel %vm55, 1, 0
  %vm1774 = vcmp.eq.s32.totalorder %v1772, 1
  %vm1775 = vcmp.eq.s32.totalorder %v1773, 1
  %1779 = vrot.lane.b32.xlu0 %v1373, 17
  %v1780 = vpop.permute.xlu0 %1779
  %1781 = vrot.lane.b32.xlu0 %v1374, 17
  %v1782 = vpop.permute.xlu0 %1781
  %1783 = vrot.lane.b32.xlu0 %v1375, 17
  %v1784 = vpop.permute.xlu0 %1783
  %vm1785 = vcmask 138240
  %v1786 = vsel %vm1785, %v1780, %v1782
  %v1787 = vsel %vm1785, %v1782, %v1784
  %v1790 = vsel %vm1774, %v1786, 0.0
  %v1791 = vsel %vm1775, %v1787, 0.0
  %1794 = vrot.lane.b32.xlu0 %v1790, 112
  %v1795 = vpop.permute.xlu0 %1794
  %1796 = vrot.lane.b32.xlu0 %v1791, 112
  %v1797 = vpop.permute.xlu0 %1796
  %v1798 = vsel %vm453, %v1795, %v1797
  %v1802 = vadd.f32 %v1561, %v1795
  %v1803 = vadd.f32 %v1562, %v1798
  %v1804 = vadd.f32 %v1563, %v1797
  %v1805 = vsel %vm56, 1, 0
  %v1806 = vsel %vm57, 1, 0
  %vm1807 = vcmp.eq.s32.totalorder %v1805, 1
  %vm1808 = vcmp.eq.s32.totalorder %v1806, 1
  %1812 = vrot.lane.b32.xlu0 %v1749, 15
  %v1813 = vpop.permute.xlu0 %1812
  %1814 = vrot.lane.b32.xlu0 %v1750, 15
  %v1815 = vpop.permute.xlu0 %1814
  %1816 = vrot.lane.b32.xlu0 %v1751, 15
  %v1817 = vpop.permute.xlu0 %1816
  %vm1818 = vcmask 121856
  %v1819 = vsel %vm1818, %v1813, %v1815
  %v1820 = vsel %vm1818, %v1815, %v1817
  %v1823 = vsel %vm1807, %v1819, 0.0
  %v1824 = vsel %vm1808, %v1820, 0.0
  %1827 = vrot.lane.b32.xlu0 %v1823, 112
  %v1828 = vpop.permute.xlu0 %1827
  %1829 = vrot.lane.b32.xlu0 %v1824, 112
  %v1830 = vpop.permute.xlu0 %1829
  %v1831 = vsel %vm453, %v1828, %v1830
  %v1835 = vadd.f32 %v1802, %v1828
  %v1836 = vadd.f32 %v1803, %v1831
  %v1837 = vadd.f32 %v1804, %v1830
  %v1838 = vmax.f32 %v1835, 0.0
  %v1839 = vmax.f32 %v1836, 0.0
  %v1840 = vmax.f32 %v1837, 0.0
  %v1841 = vld [vmem:[%s3] sm:$0xff]
  %1843 = vset.pattern.permute.xlu0 0
  %1844 = vperm.xlu0 %1843, %v1841
  %v1845 = vpop.permute.xlu0 %1844
  %v1847 = vmul.f32 %v1845, %v1838
  %v1848 = vmul.f32 %v1845, %v1839
  %v1849 = vmul.f32 %v1845, %v1840
  %vm1850 = vcmask 1048448
  %v1851 = vsel %vm1850, %v1847, 0.0
  %v1852 = vrot.slane %v1851, 4
  %v1853 = vadd.f32 %v1851, %v1852
  %v1854 = vrot.slane %v1853, 2
  %v1855 = vadd.f32 %v1853, %v1854
  %v1856 = vrot.slane %v1855, 1
  %v1857 = vadd.f32 %v1855, %v1856
  %v1858 = vrot.slane %v1848, 4
  %v1859 = vadd.f32 %v1848, %v1858
  %v1860 = vrot.slane %v1859, 2
  %v1861 = vadd.f32 %v1859, %v1860
  %v1862 = vrot.slane %v1861, 1
  %v1863 = vadd.f32 %v1861, %v1862
  %v1864 = vsel %vm453, %v1849, 0.0
  %v1865 = vrot.slane %v1864, 4
  %v1866 = vadd.f32 %v1864, %v1865
  %v1867 = vrot.slane %v1866, 2
  %v1868 = vadd.f32 %v1866, %v1867
  %v1869 = vrot.slane %v1868, 1
  %v1870 = vadd.f32 %v1868, %v1869
  %s1871 = sld [smem:[#allocation3]]
  %v1872 = vstv %s1871
  %v1873 = vadd.f32 %v1857, %v1872
  %v1874 = vadd.f32 %v1863, %v1872
  %v1875 = vadd.f32 %v1870, %v1872
  %1879 = vrot.lane.b32.xlu0 %v1393, 17
  %v1880 = vpop.permute.xlu0 %1879
  %1881 = vrot.lane.b32.xlu0 %v1394, 17
  %v1882 = vpop.permute.xlu0 %1881
  %1883 = vrot.lane.b32.xlu0 %v1395, 17
  %v1884 = vpop.permute.xlu0 %1883
  %v1885 = vsel %vm1785, %v1880, %v1882
  %v1886 = vsel %vm1785, %v1882, %v1884
  %v1889 = vsel %vm1774, %v1885, 0.0
  %v1890 = vsel %vm1775, %v1886, 0.0
  %1893 = vrot.lane.b32.xlu0 %v1889, 112
  %v1894 = vpop.permute.xlu0 %1893
  %1895 = vrot.lane.b32.xlu0 %v1890, 112
  %v1896 = vpop.permute.xlu0 %1895
  %v1897 = vsel %vm453, %v1894, %v1896
  %v1901 = vadd.f32 %v1581, %v1894
  %v1902 = vadd.f32 %v1582, %v1897
  %v1903 = vadd.f32 %v1583, %v1896
  %1907 = vrot.lane.b32.xlu0 %v1769, 15
  %v1908 = vpop.permute.xlu0 %1907
  %1909 = vrot.lane.b32.xlu0 %v1770, 15
  %v1910 = vpop.permute.xlu0 %1909
  %1911 = vrot.lane.b32.xlu0 %v1771, 15
  %v1912 = vpop.permute.xlu0 %1911
  %v1913 = vsel %vm1818, %v1908, %v1910
  %v1914 = vsel %vm1818, %v1910, %v1912
  %v1917 = vsel %vm1807, %v1913, 0.0
  %v1918 = vsel %vm1808, %v1914, 0.0
  %1921 = vrot.lane.b32.xlu0 %v1917, 112
  %v1922 = vpop.permute.xlu0 %1921
  %1923 = vrot.lane.b32.xlu0 %v1918, 112
  %v1924 = vpop.permute.xlu0 %1923
  %v1925 = vsel %vm453, %v1922, %v1924
  %v1929 = vadd.f32 %v1901, %v1922
  %v1930 = vadd.f32 %v1902, %v1925
  %v1931 = vadd.f32 %v1903, %v1924
  %v1932 = vmax.f32 %v1929, 0.0
  %v1933 = vmax.f32 %v1930, 0.0
  %v1934 = vmax.f32 %v1931, 0.0
  %v1935 = vmul.f32 %v1845, %v1932
  %v1936 = vmul.f32 %v1845, %v1933
  %v1937 = vmul.f32 %v1845, %v1934
  %v1938 = vsel %vm1850, %v1935, 0.0
  %v1939 = vrot.slane %v1938, 4
  %v1940 = vadd.f32 %v1938, %v1939
  %v1941 = vrot.slane %v1940, 2
  %v1942 = vadd.f32 %v1940, %v1941
  %v1943 = vrot.slane %v1942, 1
  %v1944 = vadd.f32 %v1942, %v1943
  %v1945 = vrot.slane %v1936, 4
  %v1946 = vadd.f32 %v1936, %v1945
  %v1947 = vrot.slane %v1946, 2
  %v1948 = vadd.f32 %v1946, %v1947
  %v1949 = vrot.slane %v1948, 1
  %v1950 = vadd.f32 %v1948, %v1949
  %v1951 = vsel %vm453, %v1937, 0.0
  %v1952 = vrot.slane %v1951, 4
  %v1953 = vadd.f32 %v1951, %v1952
  %v1954 = vrot.slane %v1953, 2
  %v1955 = vadd.f32 %v1953, %v1954
  %v1956 = vrot.slane %v1955, 1
  %v1957 = vadd.f32 %v1955, %v1956
  %v1958 = vadd.f32 %v1944, %v1872
  %v1959 = vadd.f32 %v1950, %v1872
  %v1960 = vadd.f32 %v1957, %v1872
  %vm1961 = vcmask 1040384
  %v1962 = vsel %vm1961, %v1873, %v1958
  %v1963 = vsel %vm1961, %v1874, %v1959
  %v1964 = vsel %vm1961, %v1875, %v1960
  %v1968 = vcombine.low %v1962, %v1963
  %v1970 = vunpack.c.l.s4 1983009808
  %v1971 = vunpack.c.0.s8 %v1970
  %v1972 = vlaneseq
  %v1973 = vshrl.u32 %v1972, 7
  %v1974 = vsub.s32 %v1971, %v1973
  %v1975 = vrot.slane %v1968, %v1974
  %v1977 = vunpack.c.l.s4 1983009808
  %v1978 = vunpack.c.0.s8 %v1977
  %v1979 = vlaneseq
  %v1980 = vshrl.u32 %v1979, 7
  %v1981 = vsub.s32 %v1978, %v1980
  %v1982 = vrot.slane %v1964, %v1981
  %v1983 = vcombine.low %v1975, %v1982
  %1984 = vrot.lane.b32.xlu0 %v1983, 16
  %v1985 = vpop.permute.xlu0 %1984
  %v1986 = vrot.slane %v1985, 2
  %vm1987 = vcmask 130048
  %v1988 = vsel %vm1987, %v1985, %v1986
  %1990 = vst [vmem:[%s5] sm:$0xf] %v1988
  // Predicated region
  $region22: #{combined_model.1} parent=0 // pred_check
    _
  $region23: #{combined_model.1} parent=0 // pred_check_branch
    %1992 = sbr.rel (0) target = $region25
  $region24: #{combined_model.1} parent=0 // pred_region
    _
  $region25: #{combined_model.1} parent=0 // pred_fallthru
    _
  // Predicated region
  $region26: #{combined_model.1} parent=0 // pred_check
    _
  $region27: #{combined_model.1} parent=0 // pred_check_branch
    %1994 = sbr.rel (0) target = $region29
  $region28: #{combined_model.1} parent=0 // pred_region
    _
  $region29: #{combined_model.1} parent=0 // pred_fallthru
    _

</llo_original>
